<compile_context>
chip_gen: v7x
topology: tpu7x:2x2x1
jax: 0.10.0
libtpu: 0.0.40
codegen_flags: <defaults>
</compile_context>

<pallas_src>
import functools

import jax
import jax.numpy as jnp
import numpy as np
from jax import lax
from jax.experimental import pallas as pl
from jax.experimental.pallas import tpu as pltpu

_BN_EPS = 1e-5
_DIST_EPS = 1e-8
_VMEM_LIMIT_BYTES = 32 * 1024 * 1024

_COMPILER_PARAMS = pltpu.CompilerParams(
    dimension_semantics=("parallel", "parallel"),   # (B, N-tiles): megacore-splittable
    vmem_limit_bytes=_VMEM_LIMIT_BYTES,
)


def _default_tile_n(n):
    if n % 128 != 0:
        return n                      # ragged fallback: single tile along N
    for t in (512, 256, 128):
        if n % t == 0:
            return t
    return 128


# ---------------------------------------------------------------------------
# Kernels
# ---------------------------------------------------------------------------
def _make_interp_layer0_kernel(S, TN, C0, has_feat1):
    """3-NN inverse-distance interpolation fused with the layer-0 GEMM.

    Emits the layer-0 preactivation tile plus per-tile (sum, sumsq) BN partials.
    """
    f32 = jnp.float32

    def kernel(*refs):
        it = iter(refs)
        if S != 1:
            x1_ref = next(it)         # (TN, C)   f32
            x2_ref = next(it)         # (S,  C)   f32
            sq2_ref = next(it)        # (1,  S)   f32
        f1_ref = next(it) if has_feat1 else None     # (TN, D1)  bf16
        f2w_ref = next(it)            # (S, C0) bf16   (or (1, C0) f32 when S == 1)
        wf1_ref = next(it) if has_feat1 else None    # (D1, C0)  bf16
        y_ref = next(it)              # (TN, C0)  f32
        st_ref = next(it)             # (2,  C0)  f32

        if S == 1:
            y = jnp.broadcast_to(f2w_ref[...].astype(f32), (TN, C0))
        else:
            x1 = x1_ref[...]
            x2 = x2_ref[...]
            sq1 = jnp.sum(x1 * x1, axis=-1, keepdims=True)              # (TN, 1)
            cross = lax.dot_general(x1 * (-2.0), x2,
                                    (((1,), (1,)), ((), ())),
                                    preferred_element_type=f32)          # (TN, S)
            d = jnp.maximum(cross + sq1 + sq2_ref[...], 0.0)
            # 3rd-smallest distance per row via three masked value-only mins,
            # then a threshold mask (no one-hots / index extraction).
            d1 = jnp.min(d, axis=-1, keepdims=True)
            d2 = jnp.min(jnp.where(d > d1, d, jnp.inf), axis=-1, keepdims=True)
            d3 = jnp.min(jnp.where(d > d2, d, jnp.inf), axis=-1, keepdims=True)
            recip = jnp.where(d <= d3,
                              pl.reciprocal(d + _DIST_EPS, approx=True), 0.0)
            norm = jnp.sum(recip, axis=-1, keepdims=True)                # (TN, 1)
            wgt = (recip * pl.reciprocal(norm, approx=True)).astype(jnp.bfloat16)
            # gather + layer-0 interp half, reassociated: wgt @ (feat2 @ W0_int)
            y = jnp.dot(wgt, f2w_ref[...], preferred_element_type=f32)   # (TN, C0)
        if has_feat1:
            y = y + jnp.dot(f1_ref[...], wf1_ref[...], preferred_element_type=f32)
        y_ref[...] = y
        # per-tile BN partial statistics on the otherwise idle MXU
        ones_row = jnp.ones((1, TN), f32)
        st_ref[0:1, :] = jnp.dot(ones_row, y, preferred_element_type=f32)
        st_ref[1:2, :] = jnp.dot(ones_row, y * y, preferred_element_type=f32)

    return kernel


def _hidden_layer_kernel(y_ref, sc_ref, sh_ref, w_ref, o_ref, st_ref):
    """BN(prev, folded scale/shift) + ReLU fused with the next GEMM, N-major."""
    f32 = jnp.float32
    tn = y_ref.shape[0]
    a = jnp.maximum(y_ref[...] * sc_ref[...] + sh_ref[...], 0.0).astype(jnp.bfloat16)
    y = jnp.dot(a, w_ref[...], preferred_element_type=f32)
    o_ref[...] = y
    ones_row = jnp.ones((1, tn), f32)
    st_ref[0:1, :] = jnp.dot(ones_row, y, preferred_element_type=f32)
    st_ref[1:2, :] = jnp.dot(ones_row, y * y, preferred_element_type=f32)


def _last_layer_kernel(y_ref, sc_ref, sh_ref, wt_ref, z_ref, st_ref):
    """BN(prev) + ReLU fused with the last GEMM, emitted channel-major (C_last, TN)."""
    f32 = jnp.float32
    a = jnp.maximum(y_ref[...] * sc_ref[...] + sh_ref[...], 0.0).astype(jnp.bfloat16)
    # (C_last, Cp) contracted with (TN, Cp) over both last dims -> (C_last, TN):
    # channel-major straight off the MXU, no XLU transpose, lane-dense N store.
    z = lax.dot_general(wt_ref[...], a, (((1,), (1,)), ((), ())),
                        preferred_element_type=f32)
    z_ref[...] = z
    st_ref[:, 0:1] = jnp.sum(z, axis=-1, keepdims=True)
    st_ref[:, 1:2] = jnp.sum(z * z, axis=-1, keepdims=True)


def _bn_relu_cmajor_kernel(z_ref, sc_ref, sh_ref, o_ref):
    """Final BN+ReLU on channel-major [C_last, TN] tiles (lane-dense N store)."""
    o_ref[...] = jnp.maximum(z_ref[...] * sc_ref[...] + sh_ref[...], 0.0)


def _bn_relu_transpose_kernel(y_ref, sc_ref, sh_ref, o_ref):
    """Only used for the single-layer edge case: BN+ReLU + small tile transpose."""
    o_ref[...] = jnp.maximum(y_ref[...] * sc_ref[...] + sh_ref[...], 0.0).T


# ---------------------------------------------------------------------------
# Host-side helpers (tiny plain-JAX glue between pallas_calls)
# ---------------------------------------------------------------------------
def _bn_scale_shift(stats, gamma, beta, m, channels_last=True):
    """Reduce per-tile partial (sum, sumsq) stats and fold BN into scale/shift."""
    tot = jnp.sum(stats, axis=(0, 1))
    if not channels_last:
        tot = tot.T                      # (C, 2) -> (2, C)
    mean = tot[0] / m
    var = jnp.maximum(tot[1] / m - mean * mean, 0.0)
    scale = gamma * lax.rsqrt(var + _BN_EPS)
    shift = beta - mean * scale
    return scale, shift


# ---------------------------------------------------------------------------
# Wrapper
# ---------------------------------------------------------------------------
@functools.partial(jax.jit, static_argnames=("tile_n",))
def feature_propagation_forward(x1, x2, feat1, feat2, params, tile_n=None):
    """params: tuple of (w, b, gamma, beta) per layer, w stored as [Cin, Cout].
    The Conv1d bias b is accepted but unused: train-mode BN cancels it exactly.
    Returns [B, C_last, N] (PyTorch NCW), matching FeaturePropagation.forward."""
    f32, bf16 = jnp.float32, jnp.bfloat16
    x1 = x1.astype(f32)
    feat2 = feat2.astype(f32)
    B, N, C = x1.shape
    S = x2.shape[1]
    has_feat1 = feat1 is not None
    D1 = feat1.shape[-1] if has_feat1 else 0
    widths = tuple(int(w.shape[1]) for (w, _, _, _) in params)
    L = len(widths)
    C0 = widths[0]
    M = B * N

    TN = _default_tile_n(N) if tile_n is None else int(tile_n)
    assert N % TN == 0, "N must be divisible by the N tile"
    GN = N // TN
    grid = (B, GN)

    # ---- tiny per-batch precompute (plain JAX): feat2 @ W0_int, |x2|^2 --------
    w0 = params[0][0].astype(f32)
    f2w0 = jnp.einsum("bsd,dc->bsc", feat2, w0[D1:], precision="highest")
    f2w0 = f2w0.astype(f32 if S == 1 else bf16)           # (B, S, C0)

    # ---- stage 0: interpolation + layer-0 GEMM + partial BN stats -------------
    in_arrays, in_specs = [], []
    if S != 1:
        x2 = x2.astype(f32)
        sq2 = jnp.sum(x2 * x2, axis=-1, keepdims=True).transpose(0, 2, 1)   # (B,1,S)
        in_arrays += [x1, x2, sq2]
        in_specs += [pl.BlockSpec((None, TN, C), lambda b, n: (b, n, 0)),
                     pl.BlockSpec((None, S, C), lambda b, n: (b, 0, 0)),
                     pl.BlockSpec((None, 1, S), lambda b, n: (b, 0, 0))]
    if has_feat1:
        in_arrays.append(feat1.astype(bf16))
        in_specs.append(pl.BlockSpec((None, TN, D1), lambda b, n: (b, n, 0)))
    in_arrays.append(f2w0)
    in_specs.append(pl.BlockSpec((None, f2w0.shape[1], C0), lambda b, n: (b, 0, 0)))
    if has_feat1:
        in_arrays.append(w0[:D1].astype(bf16))
        in_specs.append(pl.BlockSpec((D1, C0), lambda b, n: (0, 0)))

    in_bytes = sum(int(np.prod(a.shape)) * a.dtype.itemsize for a in in_arrays)
    cost0 = pl.CostEstimate(
        flops=int(2 * M * (S * C + S * C0 + D1 * C0 + 2 * C0)),
        transcendentals=int(M * (S + 1)),
        bytes_accessed=int(in_bytes + 4 * (M * C0 + B * GN * 2 * C0)))

    y, stats = pl.pallas_call(
        _make_interp_layer0_kernel(S, TN, C0, has_feat1),
        grid=grid,
        in_specs=in_specs,
        out_specs=(pl.BlockSpec((None, TN, C0), lambda b, n: (b, n, 0)),
                   pl.BlockSpec((None, None, 2, C0), lambda b, n: (b, n, 0, 0))),
        out_shape=(jax.ShapeDtypeStruct((B, N, C0), f32),
                   jax.ShapeDtypeStruct((B, GN, 2, C0), f32)),
        compiler_params=_COMPILER_PARAMS,
        cost_estimate=cost0,
    )(*in_arrays)

    prev, prev_stats, prev_width = y, stats, C0
    z = None
    last_stats = None

    # ---- remaining Conv1d(k=1) layers, one pipelined pallas_call each ---------
    for li in range(1, L):
        gamma = params[li - 1][2].astype(f32)
        beta = params[li - 1][3].astype(f32)
        scale, shift = _bn_scale_shift(prev_stats, gamma, beta, M)
        scale = scale.reshape(1, prev_width)
        shift = shift.reshape(1, prev_width)
        w = params[li][0].astype(f32)
        cw = widths[li]
        gemm_cost = pl.CostEstimate(
            flops=int(2 * M * prev_width * cw + 4 * M * cw),
            transcendentals=0,
            bytes_accessed=int(4 * M * (prev_width + cw) + 2 * prev_width * cw))
        if li < L - 1:
            prev, prev_stats = pl.pallas_call(
                _hidden_layer_kernel,
                grid=grid,
                in_specs=[pl.BlockSpec((None, TN, prev_width), lambda b, n: (b, n, 0)),
                          pl.BlockSpec((1, prev_width), lambda b, n: (0, 0)),
                          pl.BlockSpec((1, prev_width), lambda b, n: (0, 0)),
                          pl.BlockSpec((prev_width, cw), lambda b, n: (0, 0))],
                out_specs=(pl.BlockSpec((None, TN, cw), lambda b, n: (b, n, 0)),
                           pl.BlockSpec((None, None, 2, cw), lambda b, n: (b, n, 0, 0))),
                out_shape=(jax.ShapeDtypeStruct((B, N, cw), f32),
                           jax.ShapeDtypeStruct((B, GN, 2, cw), f32)),
                compiler_params=_COMPILER_PARAMS,
                cost_estimate=gemm_cost,
            )(prev, scale, shift, w.astype(bf16))
            prev_width = cw
        else:
            z, last_stats = pl.pallas_call(
                _last_layer_kernel,
                grid=grid,
                in_specs=[pl.BlockSpec((None, TN, prev_width), lambda b, n: (b, n, 0)),
                          pl.BlockSpec((1, prev_width), lambda b, n: (0, 0)),
                          pl.BlockSpec((1, prev_width), lambda b, n: (0, 0)),
                          pl.BlockSpec((cw, prev_width), lambda b, n: (0, 0))],
                out_specs=(pl.BlockSpec((None, cw, TN), lambda b, n: (b, 0, n)),
                           pl.BlockSpec((None, None, cw, 2), lambda b, n: (b, n, 0, 0))),
                out_shape=(jax.ShapeDtypeStruct((B, cw, N), f32),
                           jax.ShapeDtypeStruct((B, GN, cw, 2), f32)),
                compiler_params=_COMPILER_PARAMS,
                cost_estimate=gemm_cost,
            )(prev, scale, shift, w.T.astype(bf16))

    # ---- final BN + ReLU (needs the global stats of the last layer) -----------
    gamma = params[L - 1][2].astype(f32)
    beta = params[L - 1][3].astype(f32)
    CL = widths[-1]
    ew_cost = pl.CostEstimate(flops=int(3 * M * CL), transcendentals=0,
                              bytes_accessed=int(8 * M * CL))
    if L == 1:
        scale, shift = _bn_scale_shift(prev_stats, gamma, beta, M)
        return pl.pallas_call(
            _bn_relu_transpose_kernel,
            grid=grid,
            in_specs=[pl.BlockSpec((None, TN, CL), lambda b, n: (b, n, 0)),
                      pl.BlockSpec((1, CL), lambda b, n: (0, 0)),
                      pl.BlockSpec((1, CL), lambda b, n: (0, 0))],
            out_specs=pl.BlockSpec((None, CL, TN), lambda b, n: (b, 0, n)),
            out_shape=jax.ShapeDtypeStruct((B, CL, N), f32),
            compiler_params=_COMPILER_PARAMS,
            cost_estimate=ew_cost,
        )(prev, scale.reshape(1, CL), shift.reshape(1, CL))

    scale, shift = _bn_scale_shift(last_stats, gamma, beta, M, channels_last=False)
    return pl.pallas_call(
        _bn_relu_cmajor_kernel,
        grid=grid,
        in_specs=[pl.BlockSpec((None, CL, TN), lambda b, n: (b, 0, n)),
                  pl.BlockSpec((CL, 1), lambda b, n: (0, 0)),
                  pl.BlockSpec((CL, 1), lambda b, n: (0, 0))],
        out_specs=pl.BlockSpec((None, CL, TN), lambda b, n: (b, 0, n)),
        out_shape=jax.ShapeDtypeStruct((B, CL, N), f32),
        compiler_params=_COMPILER_PARAMS,
        cost_estimate=ew_cost,
    )(z, scale.reshape(CL, 1), shift.reshape(CL, 1))


# ---------------------------------------------------------------------------
# Pure-JAX reference (keeps the Conv1d bias to verify the BN-cancellation claim)
# ---------------------------------------------------------------------------
def reference_forward(x1, x2, feat1, feat2, params):
    B, N, _ = x1.shape
    S = x2.shape[1]
    D2 = feat2.shape[-1]
    if S == 1:
        interp = jnp.broadcast_to(feat2, (B, N, D2))
    else:
        sq1 = jnp.sum(x1 ** 2, -1)[:, :, None]
        sq2 = jnp.sum(x2 ** 2, -1)[:, None, :]
        cross = jnp.einsum("bnc,bsc->bns", x1, x2, precision="highest")
        d = sq1 - 2.0 * cross + sq2
        idx = jnp.argsort(d, axis=-1)[:, :, :3]
        dd = jnp.take_along_axis(d, idx, axis=-1)
        recip = 1.0 / (dd + 1e-8)
        w = recip / jnp.sum(recip, axis=-1, keepdims=True)
        gathered = jax.vmap(lambda f, i: f[i])(feat2, idx)          # (B, N, 3, D2)
        interp = jnp.sum(gathered * w[..., None], axis=2)
    feat = (jnp.concatenate([feat1, interp], -1)
            if feat1 is not None else interp)
    for (w_, b_, g_, beta_) in params:
        y = jnp.einsum("bnc,co->bno", feat, w_, precision="highest") + b_
        mean = jnp.mean(y, axis=(0, 1), keepdims=True)
        var = jnp.mean((y - mean) ** 2, axis=(0, 1), keepdims=True)
        y = (y - mean) / jnp.sqrt(var + 1e-5) * g_ + beta_
        feat = jnp.maximum(y, 0.0)
    return jnp.transpose(feat, (0, 2, 1))


# ---------------------------------------------------------------------------
if __name__ == "__main__":
    key = jax.random.PRNGKey(0)

    # B=2, N=256 points (two 128-wide N tiles -> exercises the (B, N) grid and the
    # cross-tile BN reduction), S=8 sampled points, C=3 coords, D1=D2=16 feature
    # channels -> input_dims = 32, layer sizes = [64, 16]; output [2, 16, 256].
    B, N, S, C, D1, D2 = 2, 256, 8, 3, 16, 16
    layer_sizes = [64, 16]
    input_dims = D1 + D2

    key, k1, k2, k3, k4 = jax.random.split(key, 5)
    x1 = jax.random.normal(k1, (B, N, C), jnp.float32)
    x2 = jax.random.normal(k2, (B, S, C), jnp.float32)
    feat1 = jax.random.normal(k3, (B, N, D1), jnp.float32)
    feat2 = jax.random.normal(k4, (B, S, D2), jnp.float32)

    # deterministic synthetic parameters (Conv1d weight stored as [Cin, Cout])
    sizes = [input_dims] + layer_sizes
    params = []
    for i in range(1, len(sizes)):
        key, kw, kb, kg, kbe = jax.random.split(key, 5)
        w = jax.random.normal(kw, (sizes[i - 1], sizes[i]), jnp.float32) * 0.1
        b = jax.random.normal(kb, (sizes[i],), jnp.float32) * 0.1
        gamma = 1.0 + 0.1 * jax.random.normal(kg, (sizes[i],), jnp.float32)
        beta = 0.1 * jax.random.normal(kbe, (sizes[i],), jnp.float32)
        params.append((w, b, gamma, beta))
    params = tuple(params)

    out = feature_propagation_forward(x1, x2, feat1, feat2, params, tile_n=128)
    out = jax.block_until_ready(out)

    ref = reference_forward(x1, x2, feat1, feat2, params)
    # bf16 MXU operands + approx reciprocals -> ~1% expected deviation from the
    # all-f32 reference; 2e-2 tolerances leave comfortable margin.
    np.testing.assert_allclose(np.asarray(out), np.asarray(ref),
                               rtol=2e-2, atol=2e-2)
    assert out.shape == (B, layer_sizes[-1], N)

    print("KERNEL_OK")
</pallas_src>

<mosaic_0001>
module attributes {stable_mosaic.version = 11 : i64} {
  func.func @kernel(%arg0: i32, %arg1: i32, %arg2: memref<1x128x3xf32, #tpu.memory_space<vmem>>, %arg3: memref<1x8x3xf32, #tpu.memory_space<vmem>>, %arg4: memref<1x1x8xf32, #tpu.memory_space<vmem>>, %arg5: memref<1x128x16xbf16, #tpu.memory_space<vmem>>, %arg6: memref<1x8x64xbf16, #tpu.memory_space<vmem>>, %arg7: memref<16x64xbf16, #tpu.memory_space<vmem>>, %arg8: memref<1x128x64xf32, #tpu.memory_space<vmem>>, %arg9: memref<1x1x2x64xf32, #tpu.memory_space<vmem>>) attributes {dimension_semantics = [#tpu.dimension_semantics<parallel>, #tpu.dimension_semantics<parallel>], iteration_bounds = array<i64: 2, 2>, scalar_prefetch = 0 : i64, scratch_operands = 0 : i64, tpu.core_type = #tpu.core_type<tc>, window_params = [{transform_indices = @transform_0, window_bounds = array<i64: 1, 128, 3>}, {transform_indices = @transform_1, window_bounds = array<i64: 1, 8, 3>}, {transform_indices = @transform_2, window_bounds = array<i64: 1, 1, 8>}, {transform_indices = @transform_3, window_bounds = array<i64: 1, 128, 16>}, {transform_indices = @transform_4, window_bounds = array<i64: 1, 8, 64>}, {pipeline_mode = #tpu.pipeline_mode<synchronous>, transform_indices = @transform_5, window_bounds = array<i64: 16, 64>}, {transform_indices = @transform_6, window_bounds = array<i64: 1, 128, 64>}, {transform_indices = @transform_7, window_bounds = array<i64: 1, 1, 2, 64>}]} {
    %c0 = arith.constant 0 : index
    %c0_0 = arith.constant 0 : index
    %c0_1 = arith.constant 0 : index
    %0 = vector.load %arg2[%c0, %c0_0, %c0_1] : memref<1x128x3xf32, #tpu.memory_space<vmem>>, vector<1x128x3xf32>
    %1 = vector.shape_cast %0 : vector<1x128x3xf32> to vector<128x3xf32>
    %c0_2 = arith.constant 0 : index
    %c0_3 = arith.constant 0 : index
    %c0_4 = arith.constant 0 : index
    %2 = vector.load %arg3[%c0_2, %c0_3, %c0_4] : memref<1x8x3xf32, #tpu.memory_space<vmem>>, vector<1x8x3xf32>
    %3 = vector.shape_cast %2 : vector<1x8x3xf32> to vector<8x3xf32>
    %4 = arith.mulf %1, %1 : vector<128x3xf32>
    %cst = arith.constant dense<0.000000e+00> : vector<128xf32>
    %5 = vector.multi_reduction <add>, %4, %cst [1] : vector<128x3xf32> to vector<128xf32>
    %6 = vector.shape_cast %5 : vector<128xf32> to vector<128x1xf32>
    %cst_5 = arith.constant -2.000000e+00 : f32
    %7 = vector.broadcast %cst_5 : f32 to vector<128x3xf32>
    %8 = arith.mulf %1, %7 : vector<128x3xf32>
    %cst_6 = arith.constant dense<0.000000e+00> : vector<128x8xf32>
    %9 = tpu.matmul %8, %3, %cst_6 {dimension_numbers = #tpu.dot_dimension_numbers<[1], [1], [0], [0], [0, 0, 1, 0], [], []>} : vector<128x3xf32>, vector<8x3xf32>, vector<128x8xf32> -> vector<128x8xf32>
    %10 = vector.broadcast %6 : vector<128x1xf32> to vector<128x8xf32>
    %11 = arith.addf %9, %10 : vector<128x8xf32>
    %c0_7 = arith.constant 0 : index
    %c0_8 = arith.constant 0 : index
    %c0_9 = arith.constant 0 : index
    %12 = vector.load %arg4[%c0_7, %c0_8, %c0_9] : memref<1x1x8xf32, #tpu.memory_space<vmem>>, vector<1x1x8xf32>
    %13 = vector.shape_cast %12 : vector<1x1x8xf32> to vector<1x8xf32>
    %14 = vector.broadcast %13 : vector<1x8xf32> to vector<128x8xf32>
    %15 = arith.addf %11, %14 : vector<128x8xf32>
    %cst_10 = arith.constant 0.000000e+00 : f32
    %16 = vector.broadcast %cst_10 : f32 to vector<128x8xf32>
    %17 = arith.maximumf %15, %16 : vector<128x8xf32>
    %cst_11 = arith.constant dense<0x7F800000> : vector<128xf32>
    %18 = vector.multi_reduction <minimumf>, %17, %cst_11 [1] : vector<128x8xf32> to vector<128xf32>
    %19 = vector.shape_cast %18 : vector<128xf32> to vector<128x1xf32>
    %20 = vector.broadcast %19 : vector<128x1xf32> to vector<128x8xf32>
    %21 = arith.cmpf ogt, %17, %20 : vector<128x8xf32>
    %cst_12 = arith.constant 0x7F800000 : f32
    %22 = vector.broadcast %cst_12 : f32 to vector<128x8xf32>
    %23 = arith.select %21, %17, %22 : vector<128x8xi1>, vector<128x8xf32>
    %cst_13 = arith.constant dense<0x7F800000> : vector<128xf32>
    %24 = vector.multi_reduction <minimumf>, %23, %cst_13 [1] : vector<128x8xf32> to vector<128xf32>
    %25 = vector.shape_cast %24 : vector<128xf32> to vector<128x1xf32>
    %26 = vector.broadcast %25 : vector<128x1xf32> to vector<128x8xf32>
    %27 = arith.cmpf ogt, %17, %26 : vector<128x8xf32>
    %cst_14 = arith.constant 0x7F800000 : f32
    %28 = vector.broadcast %cst_14 : f32 to vector<128x8xf32>
    %29 = arith.select %27, %17, %28 : vector<128x8xi1>, vector<128x8xf32>
    %cst_15 = arith.constant dense<0x7F800000> : vector<128xf32>
    %30 = vector.multi_reduction <minimumf>, %29, %cst_15 [1] : vector<128x8xf32> to vector<128xf32>
    %31 = vector.shape_cast %30 : vector<128xf32> to vector<128x1xf32>
    %32 = vector.broadcast %31 : vector<128x1xf32> to vector<128x8xf32>
    %33 = arith.cmpf ole, %17, %32 : vector<128x8xf32>
    %cst_16 = arith.constant 9.99999993E-9 : f32
    %34 = vector.broadcast %cst_16 : f32 to vector<128x8xf32>
    %35 = arith.addf %17, %34 : vector<128x8xf32>
    %36 = tpu.reciprocal %35 {approx = true} : vector<128x8xf32> -> vector<128x8xf32>
    %cst_17 = arith.constant 0.000000e+00 : f32
    %37 = vector.broadcast %cst_17 : f32 to vector<128x8xf32>
    %38 = arith.select %33, %36, %37 : vector<128x8xi1>, vector<128x8xf32>
    %cst_18 = arith.constant dense<0.000000e+00> : vector<128xf32>
    %39 = vector.multi_reduction <add>, %38, %cst_18 [1] : vector<128x8xf32> to vector<128xf32>
    %40 = vector.shape_cast %39 : vector<128xf32> to vector<128x1xf32>
    %41 = tpu.reciprocal %40 {approx = true} : vector<128x1xf32> -> vector<128x1xf32>
    %42 = vector.broadcast %41 : vector<128x1xf32> to vector<128x8xf32>
    %43 = arith.mulf %38, %42 : vector<128x8xf32>
    %44 = arith.truncf %43 : vector<128x8xf32> to vector<128x8xbf16>
    %c0_19 = arith.constant 0 : index
    %c0_20 = arith.constant 0 : index
    %c0_21 = arith.constant 0 : index
    %45 = vector.load %arg6[%c0_19, %c0_20, %c0_21] : memref<1x8x64xbf16, #tpu.memory_space<vmem>>, vector<1x8x64xbf16>
    %46 = vector.shape_cast %45 : vector<1x8x64xbf16> to vector<8x64xbf16>
    %cst_22 = arith.constant dense<0.000000e+00> : vector<128x64xf32>
    %47 = tpu.matmul %44, %46, %cst_22 {dimension_numbers = #tpu.dot_dimension_numbers<[1], [0], [0], [1], [0, 0, 1, 1], [], []>} : vector<128x8xbf16>, vector<8x64xbf16>, vector<128x64xf32> -> vector<128x64xf32>
    %c0_23 = arith.constant 0 : index
    %c0_24 = arith.constant 0 : index
    %c0_25 = arith.constant 0 : index
    %48 = vector.load %arg5[%c0_23, %c0_24, %c0_25] : memref<1x128x16xbf16, #tpu.memory_space<vmem>>, vector<1x128x16xbf16>
    %49 = vector.shape_cast %48 : vector<1x128x16xbf16> to vector<128x16xbf16>
    %c0_26 = arith.constant 0 : index
    %c0_27 = arith.constant 0 : index
    %50 = vector.load %arg7[%c0_26, %c0_27] : memref<16x64xbf16, #tpu.memory_space<vmem>>, vector<16x64xbf16>
    %cst_28 = arith.constant dense<0.000000e+00> : vector<128x64xf32>
    %51 = tpu.matmul %49, %50, %cst_28 {dimension_numbers = #tpu.dot_dimension_numbers<[1], [0], [0], [1], [0, 0, 1, 1], [], []>} : vector<128x16xbf16>, vector<16x64xbf16>, vector<128x64xf32> -> vector<128x64xf32>
    %52 = arith.addf %47, %51 : vector<128x64xf32>
    %c0_29 = arith.constant 0 : index
    %c0_30 = arith.constant 0 : index
    %c0_31 = arith.constant 0 : index
    %53 = vector.load %arg8[%c0_29, %c0_30, %c0_31] : memref<1x128x64xf32, #tpu.memory_space<vmem>>, vector<1x128x64xf32>
    %54 = vector.shape_cast %53 : vector<1x128x64xf32> to vector<128x64xf32>
    %55 = vector.shape_cast %52 : vector<128x64xf32> to vector<1x128x64xf32>
    tpu.vector_store %arg8[%c0_29, %c0_30, %c0_31], %55 {strides = array<i32>} : memref<1x128x64xf32, #tpu.memory_space<vmem>>, vector<1x128x64xf32>,
    %cst_32 = arith.constant 1.000000e+00 : f32
    %56 = vector.broadcast %cst_32 : f32 to vector<1x128xf32>
    %cst_33 = arith.constant dense<0.000000e+00> : vector<1x64xf32>
    %57 = tpu.matmul %56, %52, %cst_33 {dimension_numbers = #tpu.dot_dimension_numbers<[1], [0], [0], [1], [0, 0, 1, 1], [], []>} : vector<1x128xf32>, vector<128x64xf32>, vector<1x64xf32> -> vector<1x64xf32>
    %c0_34 = arith.constant 0 : index
    %c0_35 = arith.constant 0 : index
    %c0_36 = arith.constant 0 : index
    %c0_37 = arith.constant 0 : index
    %58 = vector.load %arg9[%c0_34, %c0_35, %c0_36, %c0_37] : memref<1x1x2x64xf32, #tpu.memory_space<vmem>>, vector<1x1x1x64xf32>
    %59 = vector.shape_cast %58 : vector<1x1x1x64xf32> to vector<1x64xf32>
    %60 = vector.shape_cast %57 : vector<1x64xf32> to vector<1x1x1x64xf32>
    tpu.vector_store %arg9[%c0_34, %c0_35, %c0_36, %c0_37], %60 {strides = array<i32>} : memref<1x1x2x64xf32, #tpu.memory_space<vmem>>, vector<1x1x1x64xf32>,
    %61 = arith.mulf %52, %52 : vector<128x64xf32>
    %cst_38 = arith.constant dense<0.000000e+00> : vector<1x64xf32>
    %62 = tpu.matmul %56, %61, %cst_38 {dimension_numbers = #tpu.dot_dimension_numbers<[1], [0], [0], [1], [0, 0, 1, 1], [], []>} : vector<1x128xf32>, vector<128x64xf32>, vector<1x64xf32> -> vector<1x64xf32>
    %c0_39 = arith.constant 0 : index
    %c0_40 = arith.constant 0 : index
    %c1 = arith.constant 1 : index
    %c0_41 = arith.constant 0 : index
    %63 = vector.load %arg9[%c0_39, %c0_40, %c1, %c0_41] : memref<1x1x2x64xf32, #tpu.memory_space<vmem>>, vector<1x1x1x64xf32>
    %64 = vector.shape_cast %63 : vector<1x1x1x64xf32> to vector<1x64xf32>
    %65 = vector.shape_cast %62 : vector<1x64xf32> to vector<1x1x1x64xf32>
    tpu.vector_store %arg9[%c0_39, %c0_40, %c1, %c0_41], %65 {strides = array<i32>} : memref<1x1x2x64xf32, #tpu.memory_space<vmem>>, vector<1x1x1x64xf32>,
    return
  }
  func.func @transform_0(%arg0: i32, %arg1: i32) -> (i32, i32, i32) {
    %c0_i32 = arith.constant 0 : i32
    %c0_i32_0 = arith.constant 0 : i32
    return %arg0, %arg1, %c0_i32 : i32, i32, i32
  }
  func.func @transform_1(%arg0: i32, %arg1: i32) -> (i32, i32, i32) {
    %c0_i32 = arith.constant 0 : i32
    %c0_i32_0 = arith.constant 0 : i32
    %c0_i32_1 = arith.constant 0 : i32
    return %arg0, %c0_i32, %c0_i32_0 : i32, i32, i32
  }
  func.func @transform_2(%arg0: i32, %arg1: i32) -> (i32, i32, i32) {
    %c0_i32 = arith.constant 0 : i32
    %c0_i32_0 = arith.constant 0 : i32
    %c0_i32_1 = arith.constant 0 : i32
    return %arg0, %c0_i32, %c0_i32_0 : i32, i32, i32
  }
  func.func @transform_3(%arg0: i32, %arg1: i32) -> (i32, i32, i32) {
    %c0_i32 = arith.constant 0 : i32
    %c0_i32_0 = arith.constant 0 : i32
    return %arg0, %arg1, %c0_i32 : i32, i32, i32
  }
  func.func @transform_4(%arg0: i32, %arg1: i32) -> (i32, i32, i32) {
    %c0_i32 = arith.constant 0 : i32
    %c0_i32_0 = arith.constant 0 : i32
    %c0_i32_1 = arith.constant 0 : i32
    return %arg0, %c0_i32, %c0_i32_0 : i32, i32, i32
  }
  func.func @transform_5(%arg0: i32, %arg1: i32) -> (i32, i32) {
    %c0_i32 = arith.constant 0 : i32
    %c0_i32_0 = arith.constant 0 : i32
    %c0_i32_1 = arith.constant 0 : i32
    return %c0_i32, %c0_i32_0 : i32, i32
  }
  func.func @transform_6(%arg0: i32, %arg1: i32) -> (i32, i32, i32) {
    %c0_i32 = arith.constant 0 : i32
    %c0_i32_0 = arith.constant 0 : i32
    return %arg0, %arg1, %c0_i32 : i32, i32, i32
  }
  func.func @transform_7(%arg0: i32, %arg1: i32) -> (i32, i32, i32, i32) {
    %c0_i32 = arith.constant 0 : i32
    %c0_i32_0 = arith.constant 0 : i32
    %c0_i32_1 = arith.constant 0 : i32
    return %arg0, %arg1, %c0_i32, %c0_i32_0 : i32, i32, i32, i32
  }
}

module attributes {stable_mosaic.version = 11 : i64} {
  func.func @_bn_relu_cmajor_kernel(%arg0: i32, %arg1: i32, %arg2: memref<1x16x128xf32, #tpu.memory_space<vmem>>, %arg3: memref<16x1xf32, #tpu.memory_space<vmem>>, %arg4: memref<16x1xf32, #tpu.memory_space<vmem>>, %arg5: memref<1x16x128xf32, #tpu.memory_space<vmem>>) attributes {dimension_semantics = [#tpu.dimension_semantics<parallel>, #tpu.dimension_semantics<parallel>], iteration_bounds = array<i64: 2, 2>, scalar_prefetch = 0 : i64, scratch_operands = 0 : i64, tpu.core_type = #tpu.core_type<tc>, window_params = [{transform_indices = @transform_0, window_bounds = array<i64: 1, 16, 128>}, {pipeline_mode = #tpu.pipeline_mode<synchronous>, transform_indices = @transform_1, window_bounds = array<i64: 16, 1>}, {pipeline_mode = #tpu.pipeline_mode<synchronous>, transform_indices = @transform_2, window_bounds = array<i64: 16, 1>}, {transform_indices = @transform_3, window_bounds = array<i64: 1, 16, 128>}]} {
    %c0 = arith.constant 0 : index
    %c0_0 = arith.constant 0 : index
    %c0_1 = arith.constant 0 : index
    %0 = vector.load %arg2[%c0, %c0_0, %c0_1] : memref<1x16x128xf32, #tpu.memory_space<vmem>>, vector<1x16x128xf32>
    %1 = vector.shape_cast %0 : vector<1x16x128xf32> to vector<16x128xf32>
    %c0_2 = arith.constant 0 : index
    %c0_3 = arith.constant 0 : index
    %2 = vector.load %arg3[%c0_2, %c0_3] : memref<16x1xf32, #tpu.memory_space<vmem>>, vector<16x1xf32>
    %3 = vector.broadcast %2 : vector<16x1xf32> to vector<16x128xf32>
    %4 = arith.mulf %1, %3 : vector<16x128xf32>
    %c0_4 = arith.constant 0 : index
    %c0_5 = arith.constant 0 : index
    %5 = vector.load %arg4[%c0_4, %c0_5] : memref<16x1xf32, #tpu.memory_space<vmem>>, vector<16x1xf32>
    %6 = vector.broadcast %5 : vector<16x1xf32> to vector<16x128xf32>
    %7 = arith.addf %4, %6 : vector<16x128xf32>
    %cst = arith.constant 0.000000e+00 : f32
    %8 = vector.broadcast %cst : f32 to vector<16x128xf32>
    %9 = arith.maximumf %7, %8 : vector<16x128xf32>
    %c0_6 = arith.constant 0 : index
    %c0_7 = arith.constant 0 : index
    %c0_8 = arith.constant 0 : index
    %10 = vector.load %arg5[%c0_6, %c0_7, %c0_8] : memref<1x16x128xf32, #tpu.memory_space<vmem>>, vector<1x16x128xf32>
    %11 = vector.shape_cast %10 : vector<1x16x128xf32> to vector<16x128xf32>
    %12 = vector.shape_cast %9 : vector<16x128xf32> to vector<1x16x128xf32>
    tpu.vector_store %arg5[%c0_6, %c0_7, %c0_8], %12 {strides = array<i32>} : memref<1x16x128xf32, #tpu.memory_space<vmem>>, vector<1x16x128xf32>,
    return
  }
  func.func @transform_0(%arg0: i32, %arg1: i32) -> (i32, i32, i32) {
    %c0_i32 = arith.constant 0 : i32
    %c0_i32_0 = arith.constant 0 : i32
    return %arg0, %c0_i32, %arg1 : i32, i32, i32
  }
  func.func @transform_1(%arg0: i32, %arg1: i32) -> (i32, i32) {
    %c0_i32 = arith.constant 0 : i32
    %c0_i32_0 = arith.constant 0 : i32
    %c0_i32_1 = arith.constant 0 : i32
    return %c0_i32, %c0_i32_0 : i32, i32
  }
  func.func @transform_2(%arg0: i32, %arg1: i32) -> (i32, i32) {
    %c0_i32 = arith.constant 0 : i32
    %c0_i32_0 = arith.constant 0 : i32
    %c0_i32_1 = arith.constant 0 : i32
    return %c0_i32, %c0_i32_0 : i32, i32
  }
  func.func @transform_3(%arg0: i32, %arg1: i32) -> (i32, i32, i32) {
    %c0_i32 = arith.constant 0 : i32
    %c0_i32_0 = arith.constant 0 : i32
    return %arg0, %c0_i32, %arg1 : i32, i32, i32
  }
}

module attributes {stable_mosaic.version = 11 : i64} {
  func.func @_last_layer_kernel(%arg0: i32, %arg1: i32, %arg2: memref<1x128x64xf32, #tpu.memory_space<vmem>>, %arg3: memref<1x64xf32, #tpu.memory_space<vmem>>, %arg4: memref<1x64xf32, #tpu.memory_space<vmem>>, %arg5: memref<16x64xbf16, #tpu.memory_space<vmem>>, %arg6: memref<1x16x128xf32, #tpu.memory_space<vmem>>, %arg7: memref<1x1x16x2xf32, #tpu.memory_space<vmem>>) attributes {dimension_semantics = [#tpu.dimension_semantics<parallel>, #tpu.dimension_semantics<parallel>], iteration_bounds = array<i64: 2, 2>, scalar_prefetch = 0 : i64, scratch_operands = 0 : i64, tpu.core_type = #tpu.core_type<tc>, window_params = [{transform_indices = @transform_0, window_bounds = array<i64: 1, 128, 64>}, {pipeline_mode = #tpu.pipeline_mode<synchronous>, transform_indices = @transform_1, window_bounds = array<i64: 1, 64>}, {pipeline_mode = #tpu.pipeline_mode<synchronous>, transform_indices = @transform_2, window_bounds = array<i64: 1, 64>}, {pipeline_mode = #tpu.pipeline_mode<synchronous>, transform_indices = @transform_3, window_bounds = array<i64: 16, 64>}, {transform_indices = @transform_4, window_bounds = array<i64: 1, 16, 128>}, {transform_indices = @transform_5, window_bounds = array<i64: 1, 1, 16, 2>}]} {
    %c0 = arith.constant 0 : index
    %c0_0 = arith.constant 0 : index
    %c0_1 = arith.constant 0 : index
    %0 = vector.load %arg2[%c0, %c0_0, %c0_1] : memref<1x128x64xf32, #tpu.memory_space<vmem>>, vector<1x128x64xf32>
    %1 = vector.shape_cast %0 : vector<1x128x64xf32> to vector<128x64xf32>
    %c0_2 = arith.constant 0 : index
    %c0_3 = arith.constant 0 : index
    %2 = vector.load %arg3[%c0_2, %c0_3] : memref<1x64xf32, #tpu.memory_space<vmem>>, vector<1x64xf32>
    %3 = vector.broadcast %2 : vector<1x64xf32> to vector<128x64xf32>
    %4 = arith.mulf %1, %3 : vector<128x64xf32>
    %c0_4 = arith.constant 0 : index
    %c0_5 = arith.constant 0 : index
    %5 = vector.load %arg4[%c0_4, %c0_5] : memref<1x64xf32, #tpu.memory_space<vmem>>, vector<1x64xf32>
    %6 = vector.broadcast %5 : vector<1x64xf32> to vector<128x64xf32>
    %7 = arith.addf %4, %6 : vector<128x64xf32>
    %cst = arith.constant 0.000000e+00 : f32
    %8 = vector.broadcast %cst : f32 to vector<128x64xf32>
    %9 = arith.maximumf %7, %8 : vector<128x64xf32>
    %10 = arith.truncf %9 : vector<128x64xf32> to vector<128x64xbf16>
    %c0_6 = arith.constant 0 : index
    %c0_7 = arith.constant 0 : index
    %11 = vector.load %arg5[%c0_6, %c0_7] : memref<16x64xbf16, #tpu.memory_space<vmem>>, vector<16x64xbf16>
    %cst_8 = arith.constant dense<0.000000e+00> : vector<16x128xf32>
    %12 = tpu.matmul %11, %10, %cst_8 {dimension_numbers = #tpu.dot_dimension_numbers<[1], [1], [0], [0], [0, 0, 1, 0], [], []>} : vector<16x64xbf16>, vector<128x64xbf16>, vector<16x128xf32> -> vector<16x128xf32>
    %c0_9 = arith.constant 0 : index
    %c0_10 = arith.constant 0 : index
    %c0_11 = arith.constant 0 : index
    %13 = vector.load %arg6[%c0_9, %c0_10, %c0_11] : memref<1x16x128xf32, #tpu.memory_space<vmem>>, vector<1x16x128xf32>
    %14 = vector.shape_cast %13 : vector<1x16x128xf32> to vector<16x128xf32>
    %15 = vector.shape_cast %12 : vector<16x128xf32> to vector<1x16x128xf32>
    tpu.vector_store %arg6[%c0_9, %c0_10, %c0_11], %15 {strides = array<i32>} : memref<1x16x128xf32, #tpu.memory_space<vmem>>, vector<1x16x128xf32>,
    %cst_12 = arith.constant dense<0.000000e+00> : vector<16xf32>
    %16 = vector.multi_reduction <add>, %12, %cst_12 [1] : vector<16x128xf32> to vector<16xf32>
    %17 = vector.shape_cast %16 : vector<16xf32> to vector<16x1xf32>
    %c0_13 = arith.constant 0 : index
    %c0_14 = arith.constant 0 : index
    %c0_15 = arith.constant 0 : index
    %c0_16 = arith.constant 0 : index
    %18 = vector.load %arg7[%c0_13, %c0_14, %c0_15, %c0_16] : memref<1x1x16x2xf32, #tpu.memory_space<vmem>>, vector<1x1x16x1xf32>
    %19 = vector.shape_cast %18 : vector<1x1x16x1xf32> to vector<16x1xf32>
    %20 = vector.shape_cast %17 : vector<16x1xf32> to vector<1x1x16x1xf32>
    tpu.vector_store %arg7[%c0_13, %c0_14, %c0_15, %c0_16], %20 {strides = array<i32>} : memref<1x1x16x2xf32, #tpu.memory_space<vmem>>, vector<1x1x16x1xf32>,
    %21 = arith.mulf %12, %12 : vector<16x128xf32>
    %cst_17 = arith.constant dense<0.000000e+00> : vector<16xf32>
    %22 = vector.multi_reduction <add>, %21, %cst_17 [1] : vector<16x128xf32> to vector<16xf32>
    %23 = vector.shape_cast %22 : vector<16xf32> to vector<16x1xf32>
    %c0_18 = arith.constant 0 : index
    %c0_19 = arith.constant 0 : index
    %c0_20 = arith.constant 0 : index
    %c1 = arith.constant 1 : index
    %24 = vector.load %arg7[%c0_18, %c0_19, %c0_20, %c1] : memref<1x1x16x2xf32, #tpu.memory_space<vmem>>, vector<1x1x16x1xf32>
    %25 = vector.shape_cast %24 : vector<1x1x16x1xf32> to vector<16x1xf32>
    %26 = vector.shape_cast %23 : vector<16x1xf32> to vector<1x1x16x1xf32>
    tpu.vector_store %arg7[%c0_18, %c0_19, %c0_20, %c1], %26 {strides = array<i32>} : memref<1x1x16x2xf32, #tpu.memory_space<vmem>>, vector<1x1x16x1xf32>,
    return
  }
  func.func @transform_0(%arg0: i32, %arg1: i32) -> (i32, i32, i32) {
    %c0_i32 = arith.constant 0 : i32
    %c0_i32_0 = arith.constant 0 : i32
    return %arg0, %arg1, %c0_i32 : i32, i32, i32
  }
  func.func @transform_1(%arg0: i32, %arg1: i32) -> (i32, i32) {
    %c0_i32 = arith.constant 0 : i32
    %c0_i32_0 = arith.constant 0 : i32
    %c0_i32_1 = arith.constant 0 : i32
    return %c0_i32, %c0_i32_0 : i32, i32
  }
  func.func @transform_2(%arg0: i32, %arg1: i32) -> (i32, i32) {
    %c0_i32 = arith.constant 0 : i32
    %c0_i32_0 = arith.constant 0 : i32
    %c0_i32_1 = arith.constant 0 : i32
    return %c0_i32, %c0_i32_0 : i32, i32
  }
  func.func @transform_3(%arg0: i32, %arg1: i32) -> (i32, i32) {
    %c0_i32 = arith.constant 0 : i32
    %c0_i32_0 = arith.constant 0 : i32
    %c0_i32_1 = arith.constant 0 : i32
    return %c0_i32, %c0_i32_0 : i32, i32
  }
  func.func @transform_4(%arg0: i32, %arg1: i32) -> (i32, i32, i32) {
    %c0_i32 = arith.constant 0 : i32
    %c0_i32_0 = arith.constant 0 : i32
    return %arg0, %c0_i32, %arg1 : i32, i32, i32
  }
  func.func @transform_5(%arg0: i32, %arg1: i32) -> (i32, i32, i32, i32) {
    %c0_i32 = arith.constant 0 : i32
    %c0_i32_0 = arith.constant 0 : i32
    %c0_i32_1 = arith.constant 0 : i32
    return %arg0, %arg1, %c0_i32, %c0_i32_0 : i32, i32, i32, i32
  }
}

</mosaic_0001>

<llo_original>
// kernel: feature_propagation_forward.5
$region0: #{feature_propagation_forward.5}
  #allocation0 [shape = 'u32[]', space=smem, size = 0x4, offset = 0x4, fixed_abs, tag = 'smem constant byte address 0x4 - core index']
  #allocation1 [shape = 'u32[144,128]{1,0:T(1,128)}', space=vmem, size = 0x12000, scoped, tag = 'internal scratch']
  %s0 = inlined_call_operand.vmem [shape: f32[2,16,256], index: 0, kind: input, shape index: {}]
  %s1 = inlined_call_operand.vmem [shape: f32[16,1], index: 1, kind: input, shape index: {}]
  %s2 = inlined_call_operand.vmem [shape: f32[16,1], index: 2, kind: input, shape index: {}]
  %s3 = inlined_call_operand.hbm [shape: f32[2,16,256], index: 3, kind: output, shape index: {}]
  %s4 = sld [smem:[#allocation0]]
  $region83: #{feature_propagation_forward.5} parent=0
    _
  %s6 = ssub.s32 1, %s4
  %s7 = scalar_select 0, %s6, %s4
  $region1: #{feature_propagation_forward.5} parent=0
    #allocation2 [shape = 'u8[16384]{0}', space=vmem, size = 0x4000, scoped, tag = 'input window, operand 0']
    #allocation3 [shape = 'u8[16384]{0}', space=vmem, size = 0x4000, scoped, tag = 'output window, operand 0']
    #allocation4 [shape = 's32[2]{0}', space=sflag, size = 0x8, scoped, tag = 'scoped memory for feature_propagation_forward.5']
    %8 = vsyncpa [#allocation4], 0
    %s9 = scalar_lea.sflag [#allocation4], 1
    %10 = vsyncpa %s9, 0
    loop: start=0, step=1, limit=6
    $region2: #{feature_propagation_forward.5} parent=1 // loop_pre_header
      _
    $region3: #{feature_propagation_forward.5} parent=1 // loop_header
      %s12 = sphi 0, %s16
      %p13 = scmp.ge.s32.totalorder %s12, 6
      %s19 = sphi 0, %s31
      %s20 = sphi 0, %s27
      %s21 = sphi 0, %s19
      %s22 = sphi 0, %s20
      %s23 = sphi 0, %s21
      %s24 = sphi 0, %s22
      %s36 = sphi 0, %s38
      %s39 = sphi 0, %s36
      %s40 = sphi 0, %s39
      %s56 = sphi 0, %s40
      %s60 = sphi 0, %s60
      %s62 = sphi 0, %s60
      %s63 = sphi 0, %s62
      %s77 = sphi 0, %s63
      %s81 = sphi 0, %s81
      %s83 = sphi 0, %s81
      %s84 = sphi 0, %s83
      %s98 = sphi 0, %s84
      %s106 = sphi 0, %s108
      %s109 = sphi 0, %s106
      %s110 = sphi 0, %s109
      %s126 = sphi 0, %s110
    $region4: #{feature_propagation_forward.5} parent=1 // loop_header_branch
      %15 = sbr.rel (%p13) target = $region8
    $region5: #{feature_propagation_forward.5} parent=1 // loop_body
      %s17 = ssub.s32 %s12, 1
      %s18 = ssub.s32 %s12, 2
      %s25 = sadd.s32 1, %s20
      %p26 = scmp.ge.s32.totalorder %s25, 2
      %s27 = scalar_select %p26, 0, %s25
      %s28 = sadd.s32 1, %s19
      %s29 = scalar_select %p26, %s28, %s19
      %p30 = scmp.ge.s32.totalorder %s29, 2
      %s31 = scalar_select %p30, 0, %s29
      %s32 = ssub.s32 %s19, %s31
      %s33 = ssub.s32 %s20, %s27
      %s34 = sor.u32 %s32, %s33
      %p35 = scmp.eq.s32.totalorder %s34, 0
      %s37 = sadd.s32 %s36, 1
      %s38 = scalar_select %p35, %s36, %s37
      %p41 = pneg %p35
      %p42 = scmp.eq.s32.totalorder %s12, 3
      %p43 = por %p41, %p42
      %p44 = scmp.ne.s32.totalorder %s36, %s39
      %p45 = scmp.eq.s32.totalorder %s12, 0
      %p46 = por %p44, %p45
      %p47 = scmp.ne.s32.totalorder %s36, %s39
      %p48 = scmp.eq.s32.totalorder %s17, 3
      %p49 = por %p47, %p48
      %p50 = scmp.ne.s32.totalorder %s39, %s40
      %p51 = scmp.eq.s32.totalorder %s17, 0
      %p52 = por %p50, %p51
      %p53 = scmp.ne.s32.totalorder %s39, %s40
      %p54 = scmp.eq.s32.totalorder %s18, 3
      %p55 = por %p53, %p54
      %p57 = scmp.ne.s32.totalorder %s40, %s56
      %p58 = scmp.eq.s32.totalorder %s18, 0
      %p59 = por %p57, %p58
      %s61 = sadd.s32 %s60, 1
      %p64 = scmp.eq.s32.totalorder %s12, 3
      %p65 = scmp.ne.s32.totalorder %s60, %s62
      %p66 = scmp.eq.s32.totalorder %s12, 0
      %p67 = por %p65, %p66
      %p68 = scmp.ne.s32.totalorder %s60, %s62
      %p69 = scmp.eq.s32.totalorder %s17, 3
      %p70 = por %p68, %p69
      %p71 = scmp.ne.s32.totalorder %s62, %s63
      %p72 = scmp.eq.s32.totalorder %s17, 0
      %p73 = por %p71, %p72
      %p74 = scmp.ne.s32.totalorder %s62, %s63
      %p75 = scmp.eq.s32.totalorder %s18, 3
      %p76 = por %p74, %p75
      %p78 = scmp.ne.s32.totalorder %s63, %s77
      %p79 = scmp.eq.s32.totalorder %s18, 0
      %p80 = por %p78, %p79
      %s82 = sadd.s32 %s81, 1
      %p85 = scmp.eq.s32.totalorder %s12, 3
      %p86 = scmp.ne.s32.totalorder %s81, %s83
      %p87 = scmp.eq.s32.totalorder %s12, 0
      %p88 = por %p86, %p87
      %p89 = scmp.ne.s32.totalorder %s81, %s83
      %p90 = scmp.eq.s32.totalorder %s17, 3
      %p91 = por %p89, %p90
      %p92 = scmp.ne.s32.totalorder %s83, %s84
      %p93 = scmp.eq.s32.totalorder %s17, 0
      %p94 = por %p92, %p93
      %p95 = scmp.ne.s32.totalorder %s83, %s84
      %p96 = scmp.eq.s32.totalorder %s18, 3
      %p97 = por %p95, %p96
      %p99 = scmp.ne.s32.totalorder %s84, %s98
      %p100 = scmp.eq.s32.totalorder %s18, 0
      %p101 = por %p99, %p100
      %s102 = ssub.s32 %s19, %s31
      %s103 = ssub.s32 %s20, %s27
      %s104 = sor.u32 %s102, %s103
      %p105 = scmp.eq.s32.totalorder %s104, 0
      %s107 = sadd.s32 %s106, 1
      %s108 = scalar_select %p105, %s106, %s107
      %p111 = pneg %p105
      %p112 = scmp.eq.s32.totalorder %s12, 3
      %p113 = por %p111, %p112
      %p114 = scmp.ne.s32.totalorder %s106, %s109
      %p115 = scmp.eq.s32.totalorder %s12, 0
      %p116 = por %p114, %p115
      %p117 = scmp.ne.s32.totalorder %s106, %s109
      %p118 = scmp.eq.s32.totalorder %s17, 3
      %p119 = por %p117, %p118
      %p120 = scmp.ne.s32.totalorder %s109, %s110
      %p121 = scmp.eq.s32.totalorder %s17, 0
      %p122 = por %p120, %p121
      %p123 = scmp.ne.s32.totalorder %s109, %s110
      %p124 = scmp.eq.s32.totalorder %s18, 3
      %p125 = por %p123, %p124
      %p127 = scmp.ne.s32.totalorder %s110, %s126
      %p128 = scmp.eq.s32.totalorder %s18, 0
      %p129 = por %p127, %p128
      %p130 = scmp.le.s32.totalorder 1, %s12
      %p131 = scmp.lt.s32.totalorder %s12, 5
      %p132 = pnand %p130, %p131
      %p133 = pneg %p132
      // Predicated region
      $region9: #{feature_propagation_forward.5} parent=5 // pred_check
        _
      $region10: #{feature_propagation_forward.5} parent=5 // pred_check_branch
        %135 = sbr.rel (%p132) target = $region12
      $region11: #{feature_propagation_forward.5} parent=5 // pred_region
        %s136 = ssub.s32 %s12, 1
        // Predicated region
        $region13: #{feature_propagation_forward.5} parent=11 // pred_check
          %p137 = pneg %p73
        $region14: #{feature_propagation_forward.5} parent=11 // pred_check_branch
          %139 = sbr.rel (%p137) target = $region16
        $region15: #{feature_propagation_forward.5} parent=11 // pred_region
          _
        $region16: #{feature_propagation_forward.5} parent=11 // pred_fallthru
          _
        // Predicated region
        $region17: #{feature_propagation_forward.5} parent=11 // pred_check
          %p140 = pneg %p94
        $region18: #{feature_propagation_forward.5} parent=11 // pred_check_branch
          %142 = sbr.rel (%p140) target = $region20
        $region19: #{feature_propagation_forward.5} parent=11 // pred_region
          _
        $region20: #{feature_propagation_forward.5} parent=11 // pred_fallthru
          _
      $region12: #{feature_propagation_forward.5} parent=5 // pred_fallthru
        _
      %p143 = scmp.lt.s32.totalorder %s12, 4
      // Predicated region
      $region21: #{feature_propagation_forward.5} parent=5 // pred_check
        %p144 = pneg %p143
      $region22: #{feature_propagation_forward.5} parent=5 // pred_check_branch
        %146 = sbr.rel (%p144) target = $region24
      $region23: #{feature_propagation_forward.5} parent=5 // pred_region
        // Predicated region
        $region25: #{feature_propagation_forward.5} parent=23 // pred_check
          %p147 = pneg %p46
        $region26: #{feature_propagation_forward.5} parent=23 // pred_check_branch
          %149 = sbr.rel (%p147) target = $region28
        $region27: #{feature_propagation_forward.5} parent=23 // pred_region
          %s150 = sand.u32 %s36, 1
          %s151 = sand.u32 %s36, 1
          %s152 = smul.addr %s151, 16
          %s153 = scalar_lea.vmem [#allocation2], %s152
          %s154 = smul.addr %s19, 4
          %s155 = sadd.s32 %s20, %s154
          %s156 = smul.addr %s155, 8
          %s157 = scalar_lea.vmem %s0, %s156
          // Predicated region
          $region29: #{feature_propagation_forward.5} parent=27 // pred_check
            _
          $region30: #{feature_propagation_forward.5} parent=27 // pred_check_branch
            %159 = sbr.rel (0) target = $region32
          $region31: #{feature_propagation_forward.5} parent=27 // pred_region
            // Predicated region
            $region33: #{feature_propagation_forward.5} parent=31 // pred_check
              _
            $region34: #{feature_propagation_forward.5} parent=31 // pred_check_branch
              %161 = sbr.rel (0) target = $region36
            $region35: #{feature_propagation_forward.5} parent=31 // pred_region
              // Predicated region
              $region48: #{feature_propagation_forward.5} parent=35 // pred_check
                _
              $region49: #{feature_propagation_forward.5} parent=35 // pred_check_branch
                %178 = sbr.rel (0) target = $region51
              $region50: #{feature_propagation_forward.5} parent=35 // pred_region
                loop: start=0, step=1, limit=1
                $region52: #{feature_propagation_forward.5} parent=50 // loop_pre_header
                  _
                $region53: #{feature_propagation_forward.5} parent=50 // loop_header
                  %s180 = sphi 0, %s184
                  %p181 = scmp.ge.s32.totalorder %s180, 1
                  %s185 = sphi %s157, %s157
                  %s186 = sphi %s153, %s153
                $region54: #{feature_propagation_forward.5} parent=50 // loop_header_branch
                  %183 = sbr.rel (%p181) target = $region58
                $region55: #{feature_propagation_forward.5} parent=50 // loop_body
                  %v187 = vld [vmem:[%s185] sm:$0xff]
                  %188 = vst [vmem:[%s186] sm:$0xff] %v187
                  %v189 = vld [vmem:[%s185 + $0x10] sm:$0xff]
                  %190 = vst [vmem:[%s186 + $0x8] sm:$0xff] %v189
                $region56: #{feature_propagation_forward.5} parent=50 // loop_footer
                  %s184 = sadd.s32 1, %s180
                $region57: #{feature_propagation_forward.5} parent=50 // loop_footer_branch
                  %179 = sbr.rel target = $region53
                $region58: #{feature_propagation_forward.5} parent=50 // loop_exit
                  _
              $region51: #{feature_propagation_forward.5} parent=35 // pred_fallthru
                _
              // Predicated region
              $region59: #{feature_propagation_forward.5} parent=35 // pred_check
                _
              $region60: #{feature_propagation_forward.5} parent=35 // pred_check_branch
                %192 = sbr.rel target = $region62
              $region61: #{feature_propagation_forward.5} parent=35 // pred_region
                _
              $region62: #{feature_propagation_forward.5} parent=35 // pred_fallthru
                _
            $region36: #{feature_propagation_forward.5} parent=31 // pred_fallthru
              _
            // Predicated region
            $region37: #{feature_propagation_forward.5} parent=31 // pred_check
              _
            $region38: #{feature_propagation_forward.5} parent=31 // pred_check_branch
              %163 = sbr.rel target = $region40
            $region39: #{feature_propagation_forward.5} parent=31 // pred_region
              loop: start=0, step=1, limit=1
              $region41: #{feature_propagation_forward.5} parent=39 // loop_pre_header
                _
              $region42: #{feature_propagation_forward.5} parent=39 // loop_header
                %s166 = sphi 0, %s170
                %p167 = scmp.ge.s32.totalorder %s166, 1
                %s171 = sphi %s157, %s157
                %s172 = sphi %s153, %s153
              $region43: #{feature_propagation_forward.5} parent=39 // loop_header_branch
                %169 = sbr.rel (%p167) target = $region47
              $region44: #{feature_propagation_forward.5} parent=39 // loop_body
                %v173 = vld [vmem:[%s171] sm:$0xff]
                %174 = vst [vmem:[%s172] sm:$0xff] %v173
                %v175 = vld [vmem:[%s171 + $0x10] sm:$0xff]
                %176 = vst [vmem:[%s172 + $0x8] sm:$0xff] %v175
              $region45: #{feature_propagation_forward.5} parent=39 // loop_footer
                %s170 = sadd.s32 1, %s166
              $region46: #{feature_propagation_forward.5} parent=39 // loop_footer_branch
                %165 = sbr.rel target = $region42
              $region47: #{feature_propagation_forward.5} parent=39 // loop_exit
                _
            $region40: #{feature_propagation_forward.5} parent=31 // pred_fallthru
              _
          $region32: #{feature_propagation_forward.5} parent=27 // pred_fallthru
            _
          %193 = vnop
        $region28: #{feature_propagation_forward.5} parent=23 // pred_fallthru
          _
      $region24: #{feature_propagation_forward.5} parent=5 // pred_fallthru
        _
      %p194 = scmp.le.s32.totalorder 1, %s12
      %p195 = scmp.lt.s32.totalorder %s12, 5
      %p196 = pnand %p194, %p195
      %p197 = pneg %p196
      // Predicated region
      $region63: #{feature_propagation_forward.5} parent=5 // pred_check
        _
      $region64: #{feature_propagation_forward.5} parent=5 // pred_check_branch
        %199 = sbr.rel (%p196) target = $region66
      $region65: #{feature_propagation_forward.5} parent=5 // pred_region
        %s200 = ssub.s32 %s12, 1
        %s201 = sand.u32 %s39, 1
        %s202 = sand.u32 %s39, 1
        %s203 = smul.addr %s202, 16
        %s204 = scalar_lea.vmem [#allocation2], %s203
        // Predicated region
        $region67: #{feature_propagation_forward.5} parent=65 // pred_check
          %p205 = pneg %p52
        $region68: #{feature_propagation_forward.5} parent=65 // pred_check_branch
          %207 = sbr.rel (%p205) target = $region70
        $region69: #{feature_propagation_forward.5} parent=65 // pred_region
          _
        $region70: #{feature_propagation_forward.5} parent=65 // pred_fallthru
          _
        %s208 = sand.u32 %s39, 1
        %s209 = sand.u32 %s39, 1
        %s210 = smul.addr %s209, 16
        %s211 = scalar_lea.vmem [#allocation2], %s210
        %p212 = pneg %p52
        %p213 = pneg %p49
        %p214 = pneg %p73
        %p215 = pneg %p70
        %p216 = pneg %p94
        %p217 = pneg %p91
        %p218 = pneg %p122
        %p219 = pneg %p119
        %s220 = sand.u32 %s109, 1
        %s221 = scalar_lea.sflag [#allocation4], %s220
        %s222 = sand.u32 %s109, 1
        %s223 = smul.addr %s222, 16
        %s224 = scalar_lea.vmem [#allocation3], %s223
        %v225 = vld [vmem:[%s204] sm:$0xff]
        %v226 = vld [vmem:[%s204 + $0x8] sm:$0xff]
        %v227 = vld [vmem:[%s1] sm:$0xff]
        %v228 = vld [vmem:[%s1 + $0x8] sm:$0xff]
        %230 = vset.pattern.permute.xlu0 0
        %231 = vperm.xlu0 %230, %v227
        %v232 = vpop.permute.xlu0 %231
        %235 = vset.pattern.permute.xlu0 0
        %236 = vperm.xlu0 %235, %v228
        %v237 = vpop.permute.xlu0 %236
        %v239 = vmul.f32 %v225, %v232
        %v240 = vmul.f32 %v226, %v237
        %v241 = vld [vmem:[%s2] sm:$0xff]
        %v242 = vld [vmem:[%s2 + $0x8] sm:$0xff]
        %244 = vset.pattern.permute.xlu0 0
        %245 = vperm.xlu0 %244, %v241
        %v246 = vpop.permute.xlu0 %245
        %249 = vset.pattern.permute.xlu0 0
        %250 = vperm.xlu0 %249, %v242
        %v251 = vpop.permute.xlu0 %250
        %v253 = vadd.f32 %v239, %v246
        %v254 = vadd.f32 %v240, %v251
        %v255 = vmax.f32 %v253, 0.0
        %v256 = vmax.f32 %v254, 0.0
        %257 = vst [vmem:[%s224] sm:$0xff] %v255
        %258 = vst [vmem:[%s224 + $0x8] sm:$0xff] %v256
        %s259 = sand.u32 %s109, 1
        %s260 = scalar_lea.sflag [#allocation4], %s259
        %s261 = sand.u32 %s109, 1
        %s262 = smul.addr %s261, 16
        %s263 = scalar_lea.vmem [#allocation3], %s262
        // Predicated region
        $region71: #{feature_propagation_forward.5} parent=65 // pred_check
          %p264 = pneg %p119
        $region72: #{feature_propagation_forward.5} parent=65 // pred_check_branch
          %266 = sbr.rel (%p264) target = $region74
        $region73: #{feature_propagation_forward.5} parent=65 // pred_region
          %s268 = ssub.s32 256, 256
          %269 = vsyncadd %s260, %s268
          %s270 = smul.addr %s21, 4
          %s271 = sadd.s32 %s22, %s270
          %s272 = smul.addr %s271, 128
          %s273 = scalar_lea.hbm %s3, %s272
          %s274 = sshll.u32 %s263, 4
          %s275 = int_to_ptr.vmem [resolvable:$true] %s274
          %280 = dma.vmem_to_hbm [thread:$0]  %s275, 256, %s273, %s260, 128, 256, 8
        $region74: #{feature_propagation_forward.5} parent=65 // pred_fallthru
          _
      $region66: #{feature_propagation_forward.5} parent=5 // pred_fallthru
        _
      %p281 = scmp.le.s32.totalorder 2, %s12
      // Predicated region
      $region75: #{feature_propagation_forward.5} parent=5 // pred_check
        %p282 = pneg %p281
      $region76: #{feature_propagation_forward.5} parent=5 // pred_check_branch
        %284 = sbr.rel (%p282) target = $region78
      $region77: #{feature_propagation_forward.5} parent=5 // pred_region
        %s285 = ssub.s32 %s12, 2
        // Predicated region
        $region79: #{feature_propagation_forward.5} parent=77 // pred_check
          %p286 = pneg %p125
        $region80: #{feature_propagation_forward.5} parent=77 // pred_check_branch
          %288 = sbr.rel (%p286) target = $region82
        $region81: #{feature_propagation_forward.5} parent=77 // pred_region
          %s289 = sand.u32 %s110, 1
          %s290 = scalar_lea.sflag [#allocation4], %s289
          %s291 = sand.u32 %s110, 1
          %s292 = smul.addr %s291, 16
          %s293 = scalar_lea.vmem [#allocation3], %s292
          %294 = dma.done %s290, 256
        $region82: #{feature_propagation_forward.5} parent=77 // pred_fallthru
          _
      $region78: #{feature_propagation_forward.5} parent=5 // pred_fallthru
        _
    $region6: #{feature_propagation_forward.5} parent=1 // loop_footer
      %s16 = sadd.s32 1, %s12
    $region7: #{feature_propagation_forward.5} parent=1 // loop_footer_branch
      %11 = sbr.rel target = $region3
    $region8: #{feature_propagation_forward.5} parent=1 // loop_exit
      _
    %295 = vsyncpa [#allocation4], 1
    %s296 = scalar_lea.sflag [#allocation4], 1
    %297 = vsyncpa %s296, 1

// kernel: feature_propagation_forward.4
$region0: #{feature_propagation_forward.4}
  #allocation0 [shape = 'u32[]', space=smem, size = 0x4, offset = 0x4, fixed_abs, tag = 'smem constant byte address 0x4 - core index']
  #allocation1 [shape = 'u32[144,128]{1,0:T(1,128)}', space=vmem, size = 0x12000, scoped, tag = 'internal scratch']
  %s0 = inlined_call_operand.vmem [shape: f32[2,256,64], index: 0, kind: input, shape index: {}]
  %s1 = inlined_call_operand.vmem [shape: f32[1,64], index: 1, kind: input, shape index: {}]
  %s2 = inlined_call_operand.vmem [shape: f32[1,64], index: 2, kind: input, shape index: {}]
  %s3 = inlined_call_operand.vmem [shape: bf16[16,64], index: 3, kind: input, shape index: {}]
  %s4 = inlined_call_operand.vmem [shape: f32[2,16,256], index: 4, kind: output, shape index: {0}]
  %s5 = inlined_call_operand.vmem [shape: f32[2,2,16,2], index: 5, kind: output, shape index: {1}]
  %6 = xla_tuple %s4, %s5
  %s7 = sld [smem:[#allocation0]]
  $region91: #{feature_propagation_forward.4} parent=0
    _
  %s9 = ssub.s32 1, %s7
  %s10 = scalar_select 0, %s9, %s7
  $region1: #{feature_propagation_forward.4} parent=0
    #allocation2 [shape = 'u8[16384]{0}', space=vmem, size = 0x4000, scoped, tag = 'output window, operand 0']
    loop: start=0, step=1, limit=6
    $region2: #{feature_propagation_forward.4} parent=1 // loop_pre_header
      _
    $region3: #{feature_propagation_forward.4} parent=1 // loop_header
      %s12 = sphi 0, %s16
      %p13 = scmp.ge.s32.totalorder %s12, 6
      %s19 = sphi 0, %s31
      %s20 = sphi 0, %s27
      %s21 = sphi 0, %s19
      %s22 = sphi 0, %s20
      %s23 = sphi 0, %s21
      %s24 = sphi 0, %s22
      %s36 = sphi 0, %s38
      %s39 = sphi 0, %s36
      %s40 = sphi 0, %s39
      %s56 = sphi 0, %s40
      %s60 = sphi 0, %s60
      %s62 = sphi 0, %s60
      %s63 = sphi 0, %s62
      %s77 = sphi 0, %s63
      %s81 = sphi 0, %s81
      %s83 = sphi 0, %s81
      %s84 = sphi 0, %s83
      %s98 = sphi 0, %s84
      %s102 = sphi 0, %s102
      %s104 = sphi 0, %s102
      %s105 = sphi 0, %s104
      %s119 = sphi 0, %s105
      %s127 = sphi 0, %s129
      %s130 = sphi 0, %s127
      %s131 = sphi 0, %s130
      %s147 = sphi 0, %s131
      %s155 = sphi 0, %s157
      %s158 = sphi 0, %s155
      %s159 = sphi 0, %s158
      %s175 = sphi 0, %s159
    $region4: #{feature_propagation_forward.4} parent=1 // loop_header_branch
      %15 = sbr.rel (%p13) target = $region8
    $region5: #{feature_propagation_forward.4} parent=1 // loop_body
      %s17 = ssub.s32 %s12, 1
      %s18 = ssub.s32 %s12, 2
      %s25 = sadd.s32 1, %s20
      %p26 = scmp.ge.s32.totalorder %s25, 2
      %s27 = scalar_select %p26, 0, %s25
      %s28 = sadd.s32 1, %s19
      %s29 = scalar_select %p26, %s28, %s19
      %p30 = scmp.ge.s32.totalorder %s29, 2
      %s31 = scalar_select %p30, 0, %s29
      %s32 = ssub.s32 %s19, %s31
      %s33 = ssub.s32 %s20, %s27
      %s34 = sor.u32 %s32, %s33
      %p35 = scmp.eq.s32.totalorder %s34, 0
      %s37 = sadd.s32 %s36, 1
      %s38 = scalar_select %p35, %s36, %s37
      %p41 = pneg %p35
      %p42 = scmp.eq.s32.totalorder %s12, 3
      %p43 = por %p41, %p42
      %p44 = scmp.ne.s32.totalorder %s36, %s39
      %p45 = scmp.eq.s32.totalorder %s12, 0
      %p46 = por %p44, %p45
      %p47 = scmp.ne.s32.totalorder %s36, %s39
      %p48 = scmp.eq.s32.totalorder %s17, 3
      %p49 = por %p47, %p48
      %p50 = scmp.ne.s32.totalorder %s39, %s40
      %p51 = scmp.eq.s32.totalorder %s17, 0
      %p52 = por %p50, %p51
      %p53 = scmp.ne.s32.totalorder %s39, %s40
      %p54 = scmp.eq.s32.totalorder %s18, 3
      %p55 = por %p53, %p54
      %p57 = scmp.ne.s32.totalorder %s40, %s56
      %p58 = scmp.eq.s32.totalorder %s18, 0
      %p59 = por %p57, %p58
      %s61 = sadd.s32 %s60, 1
      %p64 = scmp.eq.s32.totalorder %s12, 3
      %p65 = scmp.ne.s32.totalorder %s60, %s62
      %p66 = scmp.eq.s32.totalorder %s12, 0
      %p67 = por %p65, %p66
      %p68 = scmp.ne.s32.totalorder %s60, %s62
      %p69 = scmp.eq.s32.totalorder %s17, 3
      %p70 = por %p68, %p69
      %p71 = scmp.ne.s32.totalorder %s62, %s63
      %p72 = scmp.eq.s32.totalorder %s17, 0
      %p73 = por %p71, %p72
      %p74 = scmp.ne.s32.totalorder %s62, %s63
      %p75 = scmp.eq.s32.totalorder %s18, 3
      %p76 = por %p74, %p75
      %p78 = scmp.ne.s32.totalorder %s63, %s77
      %p79 = scmp.eq.s32.totalorder %s18, 0
      %p80 = por %p78, %p79
      %s82 = sadd.s32 %s81, 1
      %p85 = scmp.eq.s32.totalorder %s12, 3
      %p86 = scmp.ne.s32.totalorder %s81, %s83
      %p87 = scmp.eq.s32.totalorder %s12, 0
      %p88 = por %p86, %p87
      %p89 = scmp.ne.s32.totalorder %s81, %s83
      %p90 = scmp.eq.s32.totalorder %s17, 3
      %p91 = por %p89, %p90
      %p92 = scmp.ne.s32.totalorder %s83, %s84
      %p93 = scmp.eq.s32.totalorder %s17, 0
      %p94 = por %p92, %p93
      %p95 = scmp.ne.s32.totalorder %s83, %s84
      %p96 = scmp.eq.s32.totalorder %s18, 3
      %p97 = por %p95, %p96
      %p99 = scmp.ne.s32.totalorder %s84, %s98
      %p100 = scmp.eq.s32.totalorder %s18, 0
      %p101 = por %p99, %p100
      %s103 = sadd.s32 %s102, 1
      %p106 = scmp.eq.s32.totalorder %s12, 3
      %p107 = scmp.ne.s32.totalorder %s102, %s104
      %p108 = scmp.eq.s32.totalorder %s12, 0
      %p109 = por %p107, %p108
      %p110 = scmp.ne.s32.totalorder %s102, %s104
      %p111 = scmp.eq.s32.totalorder %s17, 3
      %p112 = por %p110, %p111
      %p113 = scmp.ne.s32.totalorder %s104, %s105
      %p114 = scmp.eq.s32.totalorder %s17, 0
      %p115 = por %p113, %p114
      %p116 = scmp.ne.s32.totalorder %s104, %s105
      %p117 = scmp.eq.s32.totalorder %s18, 3
      %p118 = por %p116, %p117
      %p120 = scmp.ne.s32.totalorder %s105, %s119
      %p121 = scmp.eq.s32.totalorder %s18, 0
      %p122 = por %p120, %p121
      %s123 = ssub.s32 %s19, %s31
      %s124 = ssub.s32 %s20, %s27
      %s125 = sor.u32 %s123, %s124
      %p126 = scmp.eq.s32.totalorder %s125, 0
      %s128 = sadd.s32 %s127, 1
      %s129 = scalar_select %p126, %s127, %s128
      %p132 = pneg %p126
      %p133 = scmp.eq.s32.totalorder %s12, 3
      %p134 = por %p132, %p133
      %p135 = scmp.ne.s32.totalorder %s127, %s130
      %p136 = scmp.eq.s32.totalorder %s12, 0
      %p137 = por %p135, %p136
      %p138 = scmp.ne.s32.totalorder %s127, %s130
      %p139 = scmp.eq.s32.totalorder %s17, 3
      %p140 = por %p138, %p139
      %p141 = scmp.ne.s32.totalorder %s130, %s131
      %p142 = scmp.eq.s32.totalorder %s17, 0
      %p143 = por %p141, %p142
      %p144 = scmp.ne.s32.totalorder %s130, %s131
      %p145 = scmp.eq.s32.totalorder %s18, 3
      %p146 = por %p144, %p145
      %p148 = scmp.ne.s32.totalorder %s131, %s147
      %p149 = scmp.eq.s32.totalorder %s18, 0
      %p150 = por %p148, %p149
      %s151 = ssub.s32 %s19, %s31
      %s152 = ssub.s32 %s20, %s27
      %s153 = sor.u32 %s151, %s152
      %p154 = scmp.eq.s32.totalorder %s153, 0
      %s156 = sadd.s32 %s155, 1
      %s157 = scalar_select %p154, %s155, %s156
      %p160 = pneg %p154
      %p161 = scmp.eq.s32.totalorder %s12, 3
      %p162 = por %p160, %p161
      %p163 = scmp.ne.s32.totalorder %s155, %s158
      %p164 = scmp.eq.s32.totalorder %s12, 0
      %p165 = por %p163, %p164
      %p166 = scmp.ne.s32.totalorder %s155, %s158
      %p167 = scmp.eq.s32.totalorder %s17, 3
      %p168 = por %p166, %p167
      %p169 = scmp.ne.s32.totalorder %s158, %s159
      %p170 = scmp.eq.s32.totalorder %s17, 0
      %p171 = por %p169, %p170
      %p172 = scmp.ne.s32.totalorder %s158, %s159
      %p173 = scmp.eq.s32.totalorder %s18, 3
      %p174 = por %p172, %p173
      %p176 = scmp.ne.s32.totalorder %s159, %s175
      %p177 = scmp.eq.s32.totalorder %s18, 0
      %p178 = por %p176, %p177
      %p179 = scmp.le.s32.totalorder 1, %s12
      %p180 = scmp.lt.s32.totalorder %s12, 5
      %p181 = pnand %p179, %p180
      %p182 = pneg %p181
      // Predicated region
      $region9: #{feature_propagation_forward.4} parent=5 // pred_check
        _
      $region10: #{feature_propagation_forward.4} parent=5 // pred_check_branch
        %184 = sbr.rel (%p181) target = $region12
      $region11: #{feature_propagation_forward.4} parent=5 // pred_region
        %s185 = ssub.s32 %s12, 1
        // Predicated region
        $region13: #{feature_propagation_forward.4} parent=11 // pred_check
          %p186 = pneg %p73
        $region14: #{feature_propagation_forward.4} parent=11 // pred_check_branch
          %188 = sbr.rel (%p186) target = $region16
        $region15: #{feature_propagation_forward.4} parent=11 // pred_region
          _
        $region16: #{feature_propagation_forward.4} parent=11 // pred_fallthru
          _
        // Predicated region
        $region17: #{feature_propagation_forward.4} parent=11 // pred_check
          %p189 = pneg %p94
        $region18: #{feature_propagation_forward.4} parent=11 // pred_check_branch
          %191 = sbr.rel (%p189) target = $region20
        $region19: #{feature_propagation_forward.4} parent=11 // pred_region
          _
        $region20: #{feature_propagation_forward.4} parent=11 // pred_fallthru
          _
        // Predicated region
        $region21: #{feature_propagation_forward.4} parent=11 // pred_check
          %p192 = pneg %p115
        $region22: #{feature_propagation_forward.4} parent=11 // pred_check_branch
          %194 = sbr.rel (%p192) target = $region24
        $region23: #{feature_propagation_forward.4} parent=11 // pred_region
          _
        $region24: #{feature_propagation_forward.4} parent=11 // pred_fallthru
          _
      $region12: #{feature_propagation_forward.4} parent=5 // pred_fallthru
        _
      %p195 = scmp.lt.s32.totalorder %s12, 4
      // Predicated region
      $region25: #{feature_propagation_forward.4} parent=5 // pred_check
        %p196 = pneg %p195
      $region26: #{feature_propagation_forward.4} parent=5 // pred_check_branch
        %198 = sbr.rel (%p196) target = $region28
      $region27: #{feature_propagation_forward.4} parent=5 // pred_region
        // Predicated region
        $region29: #{feature_propagation_forward.4} parent=27 // pred_check
          %p199 = pneg %p46
        $region30: #{feature_propagation_forward.4} parent=27 // pred_check_branch
          %201 = sbr.rel (%p199) target = $region32
        $region31: #{feature_propagation_forward.4} parent=27 // pred_region
          %s202 = smul.u32 16, %s20
          %p203 = scmp.lt.s32.totalorder %s19, 1
          %s204 = scalar_select %p203, %s19, 1
          %p205 = scmp.lt.s32.totalorder %s202, 31
          %s206 = scalar_select %p205, %s202, 31
          %s207 = smul.addr %s204, 32
          %s208 = sadd.s32 %s206, %s207
          %s209 = smul.addr %s208, 8
          %s210 = scalar_lea.vmem %s0, %s209
          %s211 = smul.u32 16, %s20
        $region32: #{feature_propagation_forward.4} parent=27 // pred_fallthru
          _
      $region28: #{feature_propagation_forward.4} parent=5 // pred_fallthru
        _
      %p212 = scmp.le.s32.totalorder 1, %s12
      %p213 = scmp.lt.s32.totalorder %s12, 5
      %p214 = pnand %p212, %p213
      %p215 = pneg %p214
      // Predicated region
      $region33: #{feature_propagation_forward.4} parent=5 // pred_check
        _
      $region34: #{feature_propagation_forward.4} parent=5 // pred_check_branch
        %217 = sbr.rel (%p214) target = $region36
      $region35: #{feature_propagation_forward.4} parent=5 // pred_region
        %s218 = ssub.s32 %s12, 1
        %s219 = smul.u32 16, %s22
        %p220 = scmp.lt.s32.totalorder %s21, 1
        %s221 = scalar_select %p220, %s21, 1
        %p222 = scmp.lt.s32.totalorder %s219, 31
        %s223 = scalar_select %p222, %s219, 31
        %s224 = smul.addr %s221, 32
        %s225 = sadd.s32 %s223, %s224
        %s226 = smul.addr %s225, 8
        %s227 = scalar_lea.vmem %s0, %s226
        %p228 = pneg %p52
        %p229 = pneg %p49
        %p230 = pneg %p73
        %p231 = pneg %p70
        %p232 = pneg %p94
        %p233 = pneg %p91
        %p234 = pneg %p115
        %p235 = pneg %p112
        %p236 = pneg %p143
        %p237 = pneg %p140
        %s238 = sand.u32 %s130, 1
        %s239 = sand.u32 %s130, 1
        %s240 = smul.addr %s239, 16
        %s241 = scalar_lea.vmem [#allocation2], %s240
        %p242 = pneg %p171
        %p243 = pneg %p168
        %p244 = scmp.lt.s32.totalorder %s21, 1
        %s245 = scalar_select %p244, %s21, 1
        %p246 = scmp.lt.s32.totalorder %s22, 1
        %s247 = scalar_select %p246, %s22, 1
        %s248 = smul.addr %s247, 2
        %s249 = smul.addr %s245, 4
        %s250 = sadd.s32 %s248, %s249
        %s251 = smul.addr %s250, 8
        %s252 = scalar_lea.vmem %s5, %s251
        %s253 = smul.u32 16, %s22
        %p254 = scmp.lt.s32.totalorder %s21, 1
        %s255 = scalar_select %p254, %s21, 1
        %p256 = scmp.lt.s32.totalorder %s253, 31
        %s257 = scalar_select %p256, %s253, 31
        %s258 = smul.addr %s255, 32
        %s259 = sadd.s32 %s257, %s258
        %s260 = smul.addr %s259, 8
        %s261 = scalar_lea.vmem %s0, %s260
        %s262 = smul.u32 16, %s22
        %p263 = scmp.lt.s32.totalorder %s21, 1
        %s264 = scalar_select %p263, %s21, 1
        %p265 = scmp.lt.s32.totalorder %s22, 1
        %s266 = scalar_select %p265, %s22, 1
        %s267 = smul.addr %s266, 2
        %s268 = smul.addr %s264, 4
        %s269 = sadd.s32 %s267, %s268
        %s270 = smul.addr %s269, 8
        %s271 = scalar_lea.vmem %s5, %s270
        %v273 = vld [vmem:[%s261] sm:$0xff]
        %v274 = vld [vmem:[%s261 + $0x8] sm:$0xff]
        %v275 = vld [vmem:[%s261 + $0x10] sm:$0xff]
        %v276 = vld [vmem:[%s261 + $0x18] sm:$0xff]
        %v277 = vld [vmem:[%s261 + $0x20] sm:$0xff]
        %v278 = vld [vmem:[%s261 + $0x28] sm:$0xff]
        %v279 = vld [vmem:[%s261 + $0x30] sm:$0xff]
        %v280 = vld [vmem:[%s261 + $0x38] sm:$0xff]
        %v281 = vld [vmem:[%s261 + $0x40] sm:$0xff]
        %v282 = vld [vmem:[%s261 + $0x48] sm:$0xff]
        %v283 = vld [vmem:[%s261 + $0x50] sm:$0xff]
        %v284 = vld [vmem:[%s261 + $0x58] sm:$0xff]
        %v285 = vld [vmem:[%s261 + $0x60] sm:$0xff]
        %v286 = vld [vmem:[%s261 + $0x68] sm:$0xff]
        %v287 = vld [vmem:[%s261 + $0x70] sm:$0xff]
        %v288 = vld [vmem:[%s261 + $0x78] sm:$0xff]
        %v289 = vld [vmem:[%s1] sm:$0x1]
        %v291 = vlaneseq
        %v292 = vshrl.u32 %v291, 7
        %v293 = vsub.s32 0, %v292
        %v294 = vrot.slane %v289, %v293
        %v296 = vmul.f32 %v273, %v294
        %v297 = vmul.f32 %v274, %v294
        %v298 = vmul.f32 %v275, %v294
        %v299 = vmul.f32 %v276, %v294
        %v300 = vmul.f32 %v277, %v294
        %v301 = vmul.f32 %v278, %v294
        %v302 = vmul.f32 %v279, %v294
        %v303 = vmul.f32 %v280, %v294
        %v304 = vmul.f32 %v281, %v294
        %v305 = vmul.f32 %v282, %v294
        %v306 = vmul.f32 %v283, %v294
        %v307 = vmul.f32 %v284, %v294
        %v308 = vmul.f32 %v285, %v294
        %v309 = vmul.f32 %v286, %v294
        %v310 = vmul.f32 %v287, %v294
        %v311 = vmul.f32 %v288, %v294
        %v312 = vld [vmem:[%s2] sm:$0x1]
        %v314 = vlaneseq
        %v315 = vshrl.u32 %v314, 7
        %v316 = vsub.s32 0, %v315
        %v317 = vrot.slane %v312, %v316
        %v319 = vadd.f32 %v296, %v317
        %v320 = vadd.f32 %v297, %v317
        %v321 = vadd.f32 %v298, %v317
        %v322 = vadd.f32 %v299, %v317
        %v323 = vadd.f32 %v300, %v317
        %v324 = vadd.f32 %v301, %v317
        %v325 = vadd.f32 %v302, %v317
        %v326 = vadd.f32 %v303, %v317
        %v327 = vadd.f32 %v304, %v317
        %v328 = vadd.f32 %v305, %v317
        %v329 = vadd.f32 %v306, %v317
        %v330 = vadd.f32 %v307, %v317
        %v331 = vadd.f32 %v308, %v317
        %v332 = vadd.f32 %v309, %v317
        %v333 = vadd.f32 %v310, %v317
        %v334 = vadd.f32 %v311, %v317
        %v335 = vmax.f32 %v319, 0.0
        %v336 = vmax.f32 %v320, 0.0
        %v337 = vmax.f32 %v321, 0.0
        %v338 = vmax.f32 %v322, 0.0
        %v339 = vmax.f32 %v323, 0.0
        %v340 = vmax.f32 %v324, 0.0
        %v341 = vmax.f32 %v325, 0.0
        %v342 = vmax.f32 %v326, 0.0
        %v343 = vmax.f32 %v327, 0.0
        %v344 = vmax.f32 %v328, 0.0
        %v345 = vmax.f32 %v329, 0.0
        %v346 = vmax.f32 %v330, 0.0
        %v347 = vmax.f32 %v331, 0.0
        %v348 = vmax.f32 %v332, 0.0
        %v349 = vmax.f32 %v333, 0.0
        %v350 = vmax.f32 %v334, 0.0
        %v351 = vpack.c.bf16 %v336, %v335
        %v352 = vpack.c.bf16 %v338, %v337
        %v353 = vpack.c.bf16 %v340, %v339
        %v354 = vpack.c.bf16 %v342, %v341
        %v355 = vpack.c.bf16 %v344, %v343
        %v356 = vpack.c.bf16 %v346, %v345
        %v357 = vpack.c.bf16 %v348, %v347
        %v358 = vpack.c.bf16 %v350, %v349
        %v359 = vld [vmem:[%s3] sm:$0xf]
        %v360 = vld [vmem:[%s3 + $0x4] sm:$0xf]
        %v363 = vunpack.c.l.b16 %v359
        %v364 = vunpack.c.l.b16 %v360
        %v365 = vpack.c.b16 %v364, %v363
        %vm366 = vcmask 523264
        %v368 = vsel %vm366, %v365, 0
        %v371 = vsel %vm366, %v351, 0
        %v374 = vsel %vm366, %v352, 0
        %v377 = vsel %vm366, %v353, 0
        %v380 = vsel %vm366, %v354, 0
        %v383 = vsel %vm366, %v355, 0
        %v386 = vsel %vm366, %v356, 0
        %v389 = vsel %vm366, %v357, 0
        %v392 = vsel %vm366, %v358, 0
        %394 = vmatprep.subr.bf16.mxu0 0
        %395 = vmatpush1.bf16.xpose.msra.mxu0 %v371
        %396 = vmatprep.subr.bf16.mxu0 0
        %397 = vmatpush1.bf16.xpose.msra.mxu0 %v374
        %398 = vmatprep.subr.bf16.mxu0 0
        %399 = vmatpush1.bf16.xpose.msra.mxu0 %v377
        %400 = vmatprep.subr.bf16.mxu0 0
        %401 = vmatpush1.bf16.xpose.msra.mxu0 %v380
        %402 = vmatprep.subr.bf16.mxu0 0
        %403 = vmatpush1.bf16.xpose.msra.mxu0 %v383
        %404 = vmatprep.subr.bf16.mxu0 0
        %405 = vmatpush1.bf16.xpose.msra.mxu0 %v386
        %406 = vmatprep.subr.bf16.mxu0 0
        %407 = vmatpush1.bf16.xpose.msra.mxu0 %v389
        %408 = vmatprep.subr.bf16.mxu0 0
        %409 = vmatpush1.bf16.xpose.msra.mxu0 %v392
        %410 = vmatprep.subr.bf16.mxu0 0
        %411 = vmatpush1.bf16.xpose.msra.mxu0 0
        %412 = vmatprep.subr.bf16.mxu0 0
        %413 = vmatpush1.bf16.xpose.msra.mxu0 0
        %414 = vmatprep.subr.bf16.mxu0 0
        %415 = vmatpush1.bf16.xpose.msra.mxu0 0
        %416 = vmatprep.subr.bf16.mxu0 0
        %417 = vmatpush1.bf16.xpose.msra.mxu0 0
        %418 = vmatprep.subr.bf16.mxu0 0
        %419 = vmatpush1.bf16.xpose.msra.mxu0 0
        %420 = vmatprep.subr.bf16.mxu0 0
        %421 = vmatpush1.bf16.xpose.msra.mxu0 0
        %422 = vmatprep.subr.bf16.mxu0 0
        %423 = vmatpush1.bf16.xpose.msra.mxu0 0
        %424 = vmatprep.subr.bf16.mxu0 0
        %425 = vmatpush1.bf16.xpose.msra.mxu0 0
        %426 = vmatprep.mubr.bf16.mxu0 0
        %427 = vmatmul.mubr.bf16.gmra.mrb[0].mxu0 %v368
        %v428 = vpop.f32.mrb[0].mxu0
        %v429 = vadd.f32 0.0, %v428
        %v430 = vpop.f32.mrb[0].mxu0
        %v431 = vpop.f32.mrb[0].mxu0
        %v432 = vadd.f32 0.0, %v431
        %v433 = vpop.f32.mrb[0].mxu0
        %434 = vdwg.mxu0
        %435 = vst [vmem:[%s241] sm:$0xff] %v429
        %436 = vst [vmem:[%s241 + $0x8] sm:$0xff] %v432
        %437 = vadd.xlane.f32.xlu0 %v429
        %v438 = vpop.xlane.xlu0 %437
        %439 = vadd.xlane.f32.xlu0 %v432
        %v440 = vpop.xlane.xlu0 %439
        %vm441 = vcmask 7168
        %442 = vst.msk [vmem:[%s271] sm:$0xff] %vm441, %v438
        %443 = vst.msk [vmem:[%s271 + $0x8] sm:$0xff] %vm441, %v440
        %v444 = vmul.f32 %v429, %v429
        %v445 = vmul.f32 %v432, %v432
        %446 = vadd.xlane.f32.xlu0 %v444
        %v447 = vpop.xlane.xlu0 %446
        %448 = vadd.xlane.f32.xlu0 %v445
        %v449 = vpop.xlane.xlu0 %448
        %vm450 = vcmask 15368
        %451 = vst.msk [vmem:[%s271] sm:$0xff] %vm450, %v447
        %452 = vst.msk [vmem:[%s271 + $0x8] sm:$0xff] %vm450, %v449
        %s453 = sand.u32 %s130, 1
        %s454 = sand.u32 %s130, 1
        %s455 = smul.addr %s454, 16
        %s456 = scalar_lea.vmem [#allocation2], %s455
        %p457 = scmp.lt.s32.totalorder %s21, 1
        %s458 = scalar_select %p457, %s21, 1
        %p459 = scmp.lt.s32.totalorder %s22, 1
        %s460 = scalar_select %p459, %s22, 1
        %s461 = smul.addr %s460, 2
        %s462 = smul.addr %s458, 4
        %s463 = sadd.s32 %s461, %s462
        %s464 = smul.addr %s463, 8
        %s465 = scalar_lea.vmem %s5, %s464
        // Predicated region
        $region37: #{feature_propagation_forward.4} parent=35 // pred_check
          %p466 = pneg %p140
        $region38: #{feature_propagation_forward.4} parent=35 // pred_check_branch
          %468 = sbr.rel (%p466) target = $region40
        $region39: #{feature_propagation_forward.4} parent=35 // pred_region
          %s469 = smul.addr %s21, 4
          %s470 = sadd.s32 %s22, %s469
          %s471 = smul.addr %s470, 8
          %s472 = scalar_lea.vmem %s4, %s471
          // Predicated region
          $region41: #{feature_propagation_forward.4} parent=39 // pred_check
            _
          $region42: #{feature_propagation_forward.4} parent=39 // pred_check_branch
            %474 = sbr.rel (0) target = $region44
          $region43: #{feature_propagation_forward.4} parent=39 // pred_region
            // Predicated region
            $region45: #{feature_propagation_forward.4} parent=43 // pred_check
              _
            $region46: #{feature_propagation_forward.4} parent=43 // pred_check_branch
              %476 = sbr.rel (0) target = $region48
            $region47: #{feature_propagation_forward.4} parent=43 // pred_region
              // Predicated region
              $region60: #{feature_propagation_forward.4} parent=47 // pred_check
                _
              $region61: #{feature_propagation_forward.4} parent=47 // pred_check_branch
                %493 = sbr.rel (0) target = $region63
              $region62: #{feature_propagation_forward.4} parent=47 // pred_region
                loop: start=0, step=1, limit=1
                $region64: #{feature_propagation_forward.4} parent=62 // loop_pre_header
                  _
                $region65: #{feature_propagation_forward.4} parent=62 // loop_header
                  %s495 = sphi 0, %s499
                  %p496 = scmp.ge.s32.totalorder %s495, 1
                  %s500 = sphi %s456, %s456
                  %s501 = sphi %s472, %s472
                $region66: #{feature_propagation_forward.4} parent=62 // loop_header_branch
                  %498 = sbr.rel (%p496) target = $region70
                $region67: #{feature_propagation_forward.4} parent=62 // loop_body
                  %v502 = vld [vmem:[%s500] sm:$0xff]
                  %503 = vst [vmem:[%s501] sm:$0xff] %v502
                  %v504 = vld [vmem:[%s500 + $0x8] sm:$0xff]
                  %505 = vst [vmem:[%s501 + $0x10] sm:$0xff] %v504
                $region68: #{feature_propagation_forward.4} parent=62 // loop_footer
                  %s499 = sadd.s32 1, %s495
                $region69: #{feature_propagation_forward.4} parent=62 // loop_footer_branch
                  %494 = sbr.rel target = $region65
                $region70: #{feature_propagation_forward.4} parent=62 // loop_exit
                  _
              $region63: #{feature_propagation_forward.4} parent=47 // pred_fallthru
                _
              // Predicated region
              $region71: #{feature_propagation_forward.4} parent=47 // pred_check
                _
              $region72: #{feature_propagation_forward.4} parent=47 // pred_check_branch
                %507 = sbr.rel target = $region74
              $region73: #{feature_propagation_forward.4} parent=47 // pred_region
                _
              $region74: #{feature_propagation_forward.4} parent=47 // pred_fallthru
                _
            $region48: #{feature_propagation_forward.4} parent=43 // pred_fallthru
              _
            // Predicated region
            $region49: #{feature_propagation_forward.4} parent=43 // pred_check
              _
            $region50: #{feature_propagation_forward.4} parent=43 // pred_check_branch
              %478 = sbr.rel target = $region52
            $region51: #{feature_propagation_forward.4} parent=43 // pred_region
              loop: start=0, step=1, limit=1
              $region53: #{feature_propagation_forward.4} parent=51 // loop_pre_header
                _
              $region54: #{feature_propagation_forward.4} parent=51 // loop_header
                %s481 = sphi 0, %s485
                %p482 = scmp.ge.s32.totalorder %s481, 1
                %s486 = sphi %s456, %s456
                %s487 = sphi %s472, %s472
              $region55: #{feature_propagation_forward.4} parent=51 // loop_header_branch
                %484 = sbr.rel (%p482) target = $region59
              $region56: #{feature_propagation_forward.4} parent=51 // loop_body
                %v488 = vld [vmem:[%s486] sm:$0xff]
                %489 = vst [vmem:[%s487] sm:$0xff] %v488
                %v490 = vld [vmem:[%s486 + $0x8] sm:$0xff]
                %491 = vst [vmem:[%s487 + $0x10] sm:$0xff] %v490
              $region57: #{feature_propagation_forward.4} parent=51 // loop_footer
                %s485 = sadd.s32 1, %s481
              $region58: #{feature_propagation_forward.4} parent=51 // loop_footer_branch
                %480 = sbr.rel target = $region54
              $region59: #{feature_propagation_forward.4} parent=51 // loop_exit
                _
            $region52: #{feature_propagation_forward.4} parent=43 // pred_fallthru
              _
          $region44: #{feature_propagation_forward.4} parent=39 // pred_fallthru
            _
          %508 = vnop
        $region40: #{feature_propagation_forward.4} parent=35 // pred_fallthru
          _
        // Predicated region
        $region75: #{feature_propagation_forward.4} parent=35 // pred_check
          %p509 = pneg %p168
        $region76: #{feature_propagation_forward.4} parent=35 // pred_check_branch
          %511 = sbr.rel (%p509) target = $region78
        $region77: #{feature_propagation_forward.4} parent=35 // pred_region
          _
        $region78: #{feature_propagation_forward.4} parent=35 // pred_fallthru
          _
      $region36: #{feature_propagation_forward.4} parent=5 // pred_fallthru
        _
      %p512 = scmp.le.s32.totalorder 2, %s12
      // Predicated region
      $region79: #{feature_propagation_forward.4} parent=5 // pred_check
        %p513 = pneg %p512
      $region80: #{feature_propagation_forward.4} parent=5 // pred_check_branch
        %515 = sbr.rel (%p513) target = $region82
      $region81: #{feature_propagation_forward.4} parent=5 // pred_region
        %s516 = ssub.s32 %s12, 2
        // Predicated region
        $region83: #{feature_propagation_forward.4} parent=81 // pred_check
          %p517 = pneg %p146
        $region84: #{feature_propagation_forward.4} parent=81 // pred_check_branch
          %519 = sbr.rel (%p517) target = $region86
        $region85: #{feature_propagation_forward.4} parent=81 // pred_region
          %s520 = sand.u32 %s131, 1
          %s521 = sand.u32 %s131, 1
          %s522 = smul.addr %s521, 16
          %s523 = scalar_lea.vmem [#allocation2], %s522
        $region86: #{feature_propagation_forward.4} parent=81 // pred_fallthru
          _
        // Predicated region
        $region87: #{feature_propagation_forward.4} parent=81 // pred_check
          %p524 = pneg %p174
        $region88: #{feature_propagation_forward.4} parent=81 // pred_check_branch
          %526 = sbr.rel (%p524) target = $region90
        $region89: #{feature_propagation_forward.4} parent=81 // pred_region
          %p527 = scmp.lt.s32.totalorder %s23, 1
          %s528 = scalar_select %p527, %s23, 1
          %p529 = scmp.lt.s32.totalorder %s24, 1
          %s530 = scalar_select %p529, %s24, 1
          %s531 = smul.addr %s530, 2
          %s532 = smul.addr %s528, 4
          %s533 = sadd.s32 %s531, %s532
          %s534 = smul.addr %s533, 8
          %s535 = scalar_lea.vmem %s5, %s534
        $region90: #{feature_propagation_forward.4} parent=81 // pred_fallthru
          _
      $region82: #{feature_propagation_forward.4} parent=5 // pred_fallthru
        _
    $region6: #{feature_propagation_forward.4} parent=1 // loop_footer
      %s16 = sadd.s32 1, %s12
    $region7: #{feature_propagation_forward.4} parent=1 // loop_footer_branch
      %11 = sbr.rel target = $region3
    $region8: #{feature_propagation_forward.4} parent=1 // loop_exit
      _

// kernel: feature_propagation_forward.3
$region0: #{feature_propagation_forward.3}
  #allocation0 [shape = 'u32[]', space=smem, size = 0x4, offset = 0x4, fixed_abs, tag = 'smem constant byte address 0x4 - core index']
  #allocation1 [shape = 'u32[144,128]{1,0:T(1,128)}', space=vmem, size = 0x12000, scoped, tag = 'internal scratch']
  %s0 = inlined_call_operand.vmem [shape: f32[2,256,3], index: 0, kind: input, shape index: {}]
  %s1 = inlined_call_operand.vmem [shape: f32[2,8,3], index: 1, kind: input, shape index: {}]
  %s2 = inlined_call_operand.vmem [shape: f32[2,1,8], index: 2, kind: input, shape index: {}]
  %s3 = inlined_call_operand.vmem [shape: bf16[2,256,16], index: 3, kind: input, shape index: {}]
  %s4 = inlined_call_operand.vmem [shape: bf16[2,8,64], index: 4, kind: input, shape index: {}]
  %s5 = inlined_call_operand.vmem [shape: bf16[16,64], index: 5, kind: input, shape index: {}]
  %s6 = inlined_call_operand.vmem [shape: f32[2,256,64], index: 6, kind: output, shape index: {0}]
  %s7 = inlined_call_operand.vmem [shape: f32[2,2,2,64], index: 7, kind: output, shape index: {1}]
  %8 = xla_tuple %s6, %s7
  %s9 = sld [smem:[#allocation0]]
  $region65: #{feature_propagation_forward.3} parent=0
    _
  %s11 = ssub.s32 1, %s9
  %s12 = scalar_select 0, %s11, %s9
  loop: start=0, step=1, limit=6
  $region2: #{feature_propagation_forward.3} parent=0 // loop_pre_header
    _
  $region3: #{feature_propagation_forward.3} parent=0 // loop_header
    %s14 = sphi 0, %s18
    %p15 = scmp.ge.s32.totalorder %s14, 6
    %s21 = sphi 0, %s33
    %s22 = sphi 0, %s29
    %s23 = sphi 0, %s21
    %s24 = sphi 0, %s22
    %s25 = sphi 0, %s23
    %s26 = sphi 0, %s24
    %s38 = sphi 0, %s40
    %s41 = sphi 0, %s38
    %s42 = sphi 0, %s41
    %s58 = sphi 0, %s42
    %s64 = sphi 0, %s66
    %s67 = sphi 0, %s64
    %s68 = sphi 0, %s67
    %s84 = sphi 0, %s68
    %s90 = sphi 0, %s92
    %s93 = sphi 0, %s90
    %s94 = sphi 0, %s93
    %s110 = sphi 0, %s94
    %s118 = sphi 0, %s120
    %s121 = sphi 0, %s118
    %s122 = sphi 0, %s121
    %s138 = sphi 0, %s122
    %s144 = sphi 0, %s146
    %s147 = sphi 0, %s144
    %s148 = sphi 0, %s147
    %s164 = sphi 0, %s148
    %s168 = sphi 0, %s168
    %s170 = sphi 0, %s168
    %s171 = sphi 0, %s170
    %s185 = sphi 0, %s171
    %s193 = sphi 0, %s195
    %s196 = sphi 0, %s193
    %s197 = sphi 0, %s196
    %s213 = sphi 0, %s197
    %s221 = sphi 0, %s223
    %s224 = sphi 0, %s221
    %s225 = sphi 0, %s224
    %s241 = sphi 0, %s225
  $region4: #{feature_propagation_forward.3} parent=0 // loop_header_branch
    %17 = sbr.rel (%p15) target = $region8
  $region5: #{feature_propagation_forward.3} parent=0 // loop_body
    %s19 = ssub.s32 %s14, 1
    %s20 = ssub.s32 %s14, 2
    %s27 = sadd.s32 1, %s22
    %p28 = scmp.ge.s32.totalorder %s27, 2
    %s29 = scalar_select %p28, 0, %s27
    %s30 = sadd.s32 1, %s21
    %s31 = scalar_select %p28, %s30, %s21
    %p32 = scmp.ge.s32.totalorder %s31, 2
    %s33 = scalar_select %p32, 0, %s31
    %s34 = ssub.s32 %s21, %s33
    %s35 = ssub.s32 %s22, %s29
    %s36 = sor.u32 %s34, %s35
    %p37 = scmp.eq.s32.totalorder %s36, 0
    %s39 = sadd.s32 %s38, 1
    %s40 = scalar_select %p37, %s38, %s39
    %p43 = pneg %p37
    %p44 = scmp.eq.s32.totalorder %s14, 3
    %p45 = por %p43, %p44
    %p46 = scmp.ne.s32.totalorder %s38, %s41
    %p47 = scmp.eq.s32.totalorder %s14, 0
    %p48 = por %p46, %p47
    %p49 = scmp.ne.s32.totalorder %s38, %s41
    %p50 = scmp.eq.s32.totalorder %s19, 3
    %p51 = por %p49, %p50
    %p52 = scmp.ne.s32.totalorder %s41, %s42
    %p53 = scmp.eq.s32.totalorder %s19, 0
    %p54 = por %p52, %p53
    %p55 = scmp.ne.s32.totalorder %s41, %s42
    %p56 = scmp.eq.s32.totalorder %s20, 3
    %p57 = por %p55, %p56
    %p59 = scmp.ne.s32.totalorder %s42, %s58
    %p60 = scmp.eq.s32.totalorder %s20, 0
    %p61 = por %p59, %p60
    %s62 = ssub.s32 %s21, %s33
    %p63 = scmp.eq.s32.totalorder %s62, 0
    %s65 = sadd.s32 %s64, 1
    %s66 = scalar_select %p63, %s64, %s65
    %p69 = pneg %p63
    %p70 = scmp.eq.s32.totalorder %s14, 3
    %p71 = por %p69, %p70
    %p72 = scmp.ne.s32.totalorder %s64, %s67
    %p73 = scmp.eq.s32.totalorder %s14, 0
    %p74 = por %p72, %p73
    %p75 = scmp.ne.s32.totalorder %s64, %s67
    %p76 = scmp.eq.s32.totalorder %s19, 3
    %p77 = por %p75, %p76
    %p78 = scmp.ne.s32.totalorder %s67, %s68
    %p79 = scmp.eq.s32.totalorder %s19, 0
    %p80 = por %p78, %p79
    %p81 = scmp.ne.s32.totalorder %s67, %s68
    %p82 = scmp.eq.s32.totalorder %s20, 3
    %p83 = por %p81, %p82
    %p85 = scmp.ne.s32.totalorder %s68, %s84
    %p86 = scmp.eq.s32.totalorder %s20, 0
    %p87 = por %p85, %p86
    %s88 = ssub.s32 %s21, %s33
    %p89 = scmp.eq.s32.totalorder %s88, 0
    %s91 = sadd.s32 %s90, 1
    %s92 = scalar_select %p89, %s90, %s91
    %p95 = pneg %p89
    %p96 = scmp.eq.s32.totalorder %s14, 3
    %p97 = por %p95, %p96
    %p98 = scmp.ne.s32.totalorder %s90, %s93
    %p99 = scmp.eq.s32.totalorder %s14, 0
    %p100 = por %p98, %p99
    %p101 = scmp.ne.s32.totalorder %s90, %s93
    %p102 = scmp.eq.s32.totalorder %s19, 3
    %p103 = por %p101, %p102
    %p104 = scmp.ne.s32.totalorder %s93, %s94
    %p105 = scmp.eq.s32.totalorder %s19, 0
    %p106 = por %p104, %p105
    %p107 = scmp.ne.s32.totalorder %s93, %s94
    %p108 = scmp.eq.s32.totalorder %s20, 3
    %p109 = por %p107, %p108
    %p111 = scmp.ne.s32.totalorder %s94, %s110
    %p112 = scmp.eq.s32.totalorder %s20, 0
    %p113 = por %p111, %p112
    %s114 = ssub.s32 %s21, %s33
    %s115 = ssub.s32 %s22, %s29
    %s116 = sor.u32 %s114, %s115
    %p117 = scmp.eq.s32.totalorder %s116, 0
    %s119 = sadd.s32 %s118, 1
    %s120 = scalar_select %p117, %s118, %s119
    %p123 = pneg %p117
    %p124 = scmp.eq.s32.totalorder %s14, 3
    %p125 = por %p123, %p124
    %p126 = scmp.ne.s32.totalorder %s118, %s121
    %p127 = scmp.eq.s32.totalorder %s14, 0
    %p128 = por %p126, %p127
    %p129 = scmp.ne.s32.totalorder %s118, %s121
    %p130 = scmp.eq.s32.totalorder %s19, 3
    %p131 = por %p129, %p130
    %p132 = scmp.ne.s32.totalorder %s121, %s122
    %p133 = scmp.eq.s32.totalorder %s19, 0
    %p134 = por %p132, %p133
    %p135 = scmp.ne.s32.totalorder %s121, %s122
    %p136 = scmp.eq.s32.totalorder %s20, 3
    %p137 = por %p135, %p136
    %p139 = scmp.ne.s32.totalorder %s122, %s138
    %p140 = scmp.eq.s32.totalorder %s20, 0
    %p141 = por %p139, %p140
    %s142 = ssub.s32 %s21, %s33
    %p143 = scmp.eq.s32.totalorder %s142, 0
    %s145 = sadd.s32 %s144, 1
    %s146 = scalar_select %p143, %s144, %s145
    %p149 = pneg %p143
    %p150 = scmp.eq.s32.totalorder %s14, 3
    %p151 = por %p149, %p150
    %p152 = scmp.ne.s32.totalorder %s144, %s147
    %p153 = scmp.eq.s32.totalorder %s14, 0
    %p154 = por %p152, %p153
    %p155 = scmp.ne.s32.totalorder %s144, %s147
    %p156 = scmp.eq.s32.totalorder %s19, 3
    %p157 = por %p155, %p156
    %p158 = scmp.ne.s32.totalorder %s147, %s148
    %p159 = scmp.eq.s32.totalorder %s19, 0
    %p160 = por %p158, %p159
    %p161 = scmp.ne.s32.totalorder %s147, %s148
    %p162 = scmp.eq.s32.totalorder %s20, 3
    %p163 = por %p161, %p162
    %p165 = scmp.ne.s32.totalorder %s148, %s164
    %p166 = scmp.eq.s32.totalorder %s20, 0
    %p167 = por %p165, %p166
    %s169 = sadd.s32 %s168, 1
    %p172 = scmp.eq.s32.totalorder %s14, 3
    %p173 = scmp.ne.s32.totalorder %s168, %s170
    %p174 = scmp.eq.s32.totalorder %s14, 0
    %p175 = por %p173, %p174
    %p176 = scmp.ne.s32.totalorder %s168, %s170
    %p177 = scmp.eq.s32.totalorder %s19, 3
    %p178 = por %p176, %p177
    %p179 = scmp.ne.s32.totalorder %s170, %s171
    %p180 = scmp.eq.s32.totalorder %s19, 0
    %p181 = por %p179, %p180
    %p182 = scmp.ne.s32.totalorder %s170, %s171
    %p183 = scmp.eq.s32.totalorder %s20, 3
    %p184 = por %p182, %p183
    %p186 = scmp.ne.s32.totalorder %s171, %s185
    %p187 = scmp.eq.s32.totalorder %s20, 0
    %p188 = por %p186, %p187
    %s189 = ssub.s32 %s21, %s33
    %s190 = ssub.s32 %s22, %s29
    %s191 = sor.u32 %s189, %s190
    %p192 = scmp.eq.s32.totalorder %s191, 0
    %s194 = sadd.s32 %s193, 1
    %s195 = scalar_select %p192, %s193, %s194
    %p198 = pneg %p192
    %p199 = scmp.eq.s32.totalorder %s14, 3
    %p200 = por %p198, %p199
    %p201 = scmp.ne.s32.totalorder %s193, %s196
    %p202 = scmp.eq.s32.totalorder %s14, 0
    %p203 = por %p201, %p202
    %p204 = scmp.ne.s32.totalorder %s193, %s196
    %p205 = scmp.eq.s32.totalorder %s19, 3
    %p206 = por %p204, %p205
    %p207 = scmp.ne.s32.totalorder %s196, %s197
    %p208 = scmp.eq.s32.totalorder %s19, 0
    %p209 = por %p207, %p208
    %p210 = scmp.ne.s32.totalorder %s196, %s197
    %p211 = scmp.eq.s32.totalorder %s20, 3
    %p212 = por %p210, %p211
    %p214 = scmp.ne.s32.totalorder %s197, %s213
    %p215 = scmp.eq.s32.totalorder %s20, 0
    %p216 = por %p214, %p215
    %s217 = ssub.s32 %s21, %s33
    %s218 = ssub.s32 %s22, %s29
    %s219 = sor.u32 %s217, %s218
    %p220 = scmp.eq.s32.totalorder %s219, 0
    %s222 = sadd.s32 %s221, 1
    %s223 = scalar_select %p220, %s221, %s222
    %p226 = pneg %p220
    %p227 = scmp.eq.s32.totalorder %s14, 3
    %p228 = por %p226, %p227
    %p229 = scmp.ne.s32.totalorder %s221, %s224
    %p230 = scmp.eq.s32.totalorder %s14, 0
    %p231 = por %p229, %p230
    %p232 = scmp.ne.s32.totalorder %s221, %s224
    %p233 = scmp.eq.s32.totalorder %s19, 3
    %p234 = por %p232, %p233
    %p235 = scmp.ne.s32.totalorder %s224, %s225
    %p236 = scmp.eq.s32.totalorder %s19, 0
    %p237 = por %p235, %p236
    %p238 = scmp.ne.s32.totalorder %s224, %s225
    %p239 = scmp.eq.s32.totalorder %s20, 3
    %p240 = por %p238, %p239
    %p242 = scmp.ne.s32.totalorder %s225, %s241
    %p243 = scmp.eq.s32.totalorder %s20, 0
    %p244 = por %p242, %p243
    %p245 = scmp.le.s32.totalorder 1, %s14
    %p246 = scmp.lt.s32.totalorder %s14, 5
    %p247 = pnand %p245, %p246
    %p248 = pneg %p247
    // Predicated region
    $region9: #{feature_propagation_forward.3} parent=5 // pred_check
      _
    $region10: #{feature_propagation_forward.3} parent=5 // pred_check_branch
      %250 = sbr.rel (%p247) target = $region12
    $region11: #{feature_propagation_forward.3} parent=5 // pred_region
      %s251 = ssub.s32 %s14, 1
      // Predicated region
      $region13: #{feature_propagation_forward.3} parent=11 // pred_check
        %p252 = pneg %p181
      $region14: #{feature_propagation_forward.3} parent=11 // pred_check_branch
        %254 = sbr.rel (%p252) target = $region16
      $region15: #{feature_propagation_forward.3} parent=11 // pred_region
        _
      $region16: #{feature_propagation_forward.3} parent=11 // pred_fallthru
        _
    $region12: #{feature_propagation_forward.3} parent=5 // pred_fallthru
      _
    %p255 = scmp.lt.s32.totalorder %s14, 4
    // Predicated region
    $region17: #{feature_propagation_forward.3} parent=5 // pred_check
      %p256 = pneg %p255
    $region18: #{feature_propagation_forward.3} parent=5 // pred_check_branch
      %258 = sbr.rel (%p256) target = $region20
    $region19: #{feature_propagation_forward.3} parent=5 // pred_region
      // Predicated region
      $region21: #{feature_propagation_forward.3} parent=19 // pred_check
        %p259 = pneg %p48
      $region22: #{feature_propagation_forward.3} parent=19 // pred_check_branch
        %261 = sbr.rel (%p259) target = $region24
      $region23: #{feature_propagation_forward.3} parent=19 // pred_region
        %s262 = smul.u32 16, %s22
        %p263 = scmp.lt.s32.totalorder %s21, 1
        %s264 = scalar_select %p263, %s21, 1
        %p265 = scmp.lt.s32.totalorder %s262, 31
        %s266 = scalar_select %p265, %s262, 31
        %s267 = smul.addr %s264, 32
        %s268 = sadd.s32 %s266, %s267
        %s269 = smul.addr %s268, 8
        %s270 = scalar_lea.vmem %s0, %s269
        %s271 = smul.u32 16, %s22
      $region24: #{feature_propagation_forward.3} parent=19 // pred_fallthru
        _
      // Predicated region
      $region25: #{feature_propagation_forward.3} parent=19 // pred_check
        %p272 = pneg %p74
      $region26: #{feature_propagation_forward.3} parent=19 // pred_check_branch
        %274 = sbr.rel (%p272) target = $region28
      $region27: #{feature_propagation_forward.3} parent=19 // pred_region
        %p275 = scmp.lt.s32.totalorder %s21, 1
        %s276 = scalar_select %p275, %s21, 1
        %s277 = smul.addr %s276, 8
        %s278 = scalar_lea.vmem %s1, %s277
      $region28: #{feature_propagation_forward.3} parent=19 // pred_fallthru
        _
      // Predicated region
      $region29: #{feature_propagation_forward.3} parent=19 // pred_check
        %p279 = pneg %p100
      $region30: #{feature_propagation_forward.3} parent=19 // pred_check_branch
        %281 = sbr.rel (%p279) target = $region32
      $region31: #{feature_propagation_forward.3} parent=19 // pred_region
        %p282 = scmp.lt.s32.totalorder %s21, 1
        %s283 = scalar_select %p282, %s21, 1
        %s284 = scalar_lea.vmem %s2, %s283
      $region32: #{feature_propagation_forward.3} parent=19 // pred_fallthru
        _
      // Predicated region
      $region33: #{feature_propagation_forward.3} parent=19 // pred_check
        %p285 = pneg %p128
      $region34: #{feature_propagation_forward.3} parent=19 // pred_check_branch
        %287 = sbr.rel (%p285) target = $region36
      $region35: #{feature_propagation_forward.3} parent=19 // pred_region
        %s288 = smul.u32 16, %s22
        %p289 = scmp.lt.s32.totalorder %s21, 1
        %s290 = scalar_select %p289, %s21, 1
        %p291 = scmp.lt.s32.totalorder %s288, 31
        %s292 = scalar_select %p291, %s288, 31
        %s293 = smul.addr %s290, 32
        %s294 = sadd.s32 %s292, %s293
        %s295 = smul.addr %s294, 4
        %s296 = scalar_lea.vmem %s3, %s295
        %s297 = smul.u32 16, %s22
      $region36: #{feature_propagation_forward.3} parent=19 // pred_fallthru
        _
      // Predicated region
      $region37: #{feature_propagation_forward.3} parent=19 // pred_check
        %p298 = pneg %p154
      $region38: #{feature_propagation_forward.3} parent=19 // pred_check_branch
        %300 = sbr.rel (%p298) target = $region40
      $region39: #{feature_propagation_forward.3} parent=19 // pred_region
        %p301 = scmp.lt.s32.totalorder %s21, 1
        %s302 = scalar_select %p301, %s21, 1
        %s303 = smul.addr %s302, 4
        %s304 = scalar_lea.vmem %s4, %s303
      $region40: #{feature_propagation_forward.3} parent=19 // pred_fallthru
        _
    $region20: #{feature_propagation_forward.3} parent=5 // pred_fallthru
      _
    %p305 = scmp.le.s32.totalorder 1, %s14
    %p306 = scmp.lt.s32.totalorder %s14, 5
    %p307 = pnand %p305, %p306
    %p308 = pneg %p307
    // Predicated region
    $region41: #{feature_propagation_forward.3} parent=5 // pred_check
      _
    $region42: #{feature_propagation_forward.3} parent=5 // pred_check_branch
      %310 = sbr.rel (%p307) target = $region44
    $region43: #{feature_propagation_forward.3} parent=5 // pred_region
      %s311 = ssub.s32 %s14, 1
      %s312 = smul.u32 16, %s24
      %p313 = scmp.lt.s32.totalorder %s23, 1
      %s314 = scalar_select %p313, %s23, 1
      %p315 = scmp.lt.s32.totalorder %s312, 31
      %s316 = scalar_select %p315, %s312, 31
      %s317 = smul.addr %s314, 32
      %s318 = sadd.s32 %s316, %s317
      %s319 = smul.addr %s318, 8
      %s320 = scalar_lea.vmem %s0, %s319
      %p321 = pneg %p54
      %p322 = pneg %p51
      %p323 = scmp.lt.s32.totalorder %s23, 1
      %s324 = scalar_select %p323, %s23, 1
      %s325 = smul.addr %s324, 8
      %s326 = scalar_lea.vmem %s1, %s325
      %p327 = pneg %p80
      %p328 = pneg %p77
      %p329 = scmp.lt.s32.totalorder %s23, 1
      %s330 = scalar_select %p329, %s23, 1
      %s331 = scalar_lea.vmem %s2, %s330
      %p332 = pneg %p106
      %p333 = pneg %p103
      %s334 = smul.u32 16, %s24
      %p335 = scmp.lt.s32.totalorder %s23, 1
      %s336 = scalar_select %p335, %s23, 1
      %p337 = scmp.lt.s32.totalorder %s334, 31
      %s338 = scalar_select %p337, %s334, 31
      %s339 = smul.addr %s336, 32
      %s340 = sadd.s32 %s338, %s339
      %s341 = smul.addr %s340, 4
      %s342 = scalar_lea.vmem %s3, %s341
      %p343 = pneg %p134
      %p344 = pneg %p131
      %p345 = scmp.lt.s32.totalorder %s23, 1
      %s346 = scalar_select %p345, %s23, 1
      %s347 = smul.addr %s346, 4
      %s348 = scalar_lea.vmem %s4, %s347
      %p349 = pneg %p160
      %p350 = pneg %p157
      %p351 = pneg %p181
      %p352 = pneg %p178
      %p353 = pneg %p209
      %p354 = pneg %p206
      %s355 = smul.u32 16, %s24
      %p356 = scmp.lt.s32.totalorder %s23, 1
      %s357 = scalar_select %p356, %s23, 1
      %p358 = scmp.lt.s32.totalorder %s355, 31
      %s359 = scalar_select %p358, %s355, 31
      %s360 = smul.addr %s357, 32
      %s361 = sadd.s32 %s359, %s360
      %s362 = smul.addr %s361, 8
      %s363 = scalar_lea.vmem %s6, %s362
      %p364 = pneg %p237
      %p365 = pneg %p234
      %p366 = scmp.lt.s32.totalorder %s23, 1
      %s367 = scalar_select %p366, %s23, 1
      %p368 = scmp.lt.s32.totalorder %s24, 1
      %s369 = scalar_select %p368, %s24, 1
      %s370 = smul.addr %s367, 2
      %s371 = sadd.s32 %s369, %s370
      %s372 = smul.addr %s371, 2
      %s373 = scalar_lea.vmem %s7, %s372
      %s374 = smul.u32 16, %s24
      %p375 = scmp.lt.s32.totalorder %s23, 1
      %s376 = scalar_select %p375, %s23, 1
      %p377 = scmp.lt.s32.totalorder %s374, 31
      %s378 = scalar_select %p377, %s374, 31
      %s379 = smul.addr %s376, 32
      %s380 = sadd.s32 %s378, %s379
      %s381 = smul.addr %s380, 8
      %s382 = scalar_lea.vmem %s0, %s381
      %s383 = smul.u32 16, %s24
      %p384 = scmp.lt.s32.totalorder %s23, 1
      %s385 = scalar_select %p384, %s23, 1
      %s386 = smul.addr %s385, 8
      %s387 = scalar_lea.vmem %s1, %s386
      %p388 = scmp.lt.s32.totalorder %s23, 1
      %s389 = scalar_select %p388, %s23, 1
      %s390 = scalar_lea.vmem %s2, %s389
      %s391 = smul.u32 16, %s24
      %p392 = scmp.lt.s32.totalorder %s23, 1
      %s393 = scalar_select %p392, %s23, 1
      %p394 = scmp.lt.s32.totalorder %s391, 31
      %s395 = scalar_select %p394, %s391, 31
      %s396 = smul.addr %s393, 32
      %s397 = sadd.s32 %s395, %s396
      %s398 = smul.addr %s397, 4
      %s399 = scalar_lea.vmem %s3, %s398
      %s400 = smul.u32 16, %s24
      %p401 = scmp.lt.s32.totalorder %s23, 1
      %s402 = scalar_select %p401, %s23, 1
      %s403 = smul.addr %s402, 4
      %s404 = scalar_lea.vmem %s4, %s403
      %s405 = smul.u32 16, %s24
      %p406 = scmp.lt.s32.totalorder %s23, 1
      %s407 = scalar_select %p406, %s23, 1
      %p408 = scmp.lt.s32.totalorder %s405, 31
      %s409 = scalar_select %p408, %s405, 31
      %s410 = smul.addr %s407, 32
      %s411 = sadd.s32 %s409, %s410
      %s412 = smul.addr %s411, 8
      %s413 = scalar_lea.vmem %s6, %s412
      %s414 = smul.u32 16, %s24
      %p415 = scmp.lt.s32.totalorder %s23, 1
      %s416 = scalar_select %p415, %s23, 1
      %p417 = scmp.lt.s32.totalorder %s24, 1
      %s418 = scalar_select %p417, %s24, 1
      %s419 = smul.addr %s416, 2
      %s420 = sadd.s32 %s418, %s419
      %s421 = smul.addr %s420, 2
      %s422 = scalar_lea.vmem %s7, %s421
      %v424 = vld [vmem:[%s382] sm:$0xff]
      %v425 = vld [vmem:[%s382 + $0x8] sm:$0xff]
      %v426 = vld [vmem:[%s382 + $0x10] sm:$0xff]
      %v427 = vld [vmem:[%s382 + $0x18] sm:$0xff]
      %v428 = vld [vmem:[%s382 + $0x20] sm:$0xff]
      %v429 = vld [vmem:[%s382 + $0x28] sm:$0xff]
      %v430 = vld [vmem:[%s382 + $0x30] sm:$0xff]
      %v431 = vld [vmem:[%s382 + $0x38] sm:$0xff]
      %v432 = vld [vmem:[%s382 + $0x40] sm:$0xff]
      %v433 = vld [vmem:[%s382 + $0x48] sm:$0xff]
      %v434 = vld [vmem:[%s382 + $0x50] sm:$0xff]
      %v435 = vld [vmem:[%s382 + $0x58] sm:$0xff]
      %v436 = vld [vmem:[%s382 + $0x60] sm:$0xff]
      %v437 = vld [vmem:[%s382 + $0x68] sm:$0xff]
      %v438 = vld [vmem:[%s382 + $0x70] sm:$0xff]
      %v439 = vld [vmem:[%s382 + $0x78] sm:$0xff]
      %v440 = vld [vmem:[%s387] sm:$0xff]
      %v441 = vmul.f32 %v424, %v424
      %v442 = vmul.f32 %v425, %v425
      %v443 = vmul.f32 %v426, %v426
      %v444 = vmul.f32 %v427, %v427
      %v445 = vmul.f32 %v428, %v428
      %v446 = vmul.f32 %v429, %v429
      %v447 = vmul.f32 %v430, %v430
      %v448 = vmul.f32 %v431, %v431
      %v449 = vmul.f32 %v432, %v432
      %v450 = vmul.f32 %v433, %v433
      %v451 = vmul.f32 %v434, %v434
      %v452 = vmul.f32 %v435, %v435
      %v453 = vmul.f32 %v436, %v436
      %v454 = vmul.f32 %v437, %v437
      %v455 = vmul.f32 %v438, %v438
      %v456 = vmul.f32 %v439, %v439
      %vm457 = vcmask 23552
      %v458 = vsel %vm457, %v441, 0.0
      %459 = vadd.xlane.f32.xlu0 %v458
      %v460 = vpop.xlane.xlu0 %459
      %v461 = vsel %vm457, %v442, 0.0
      %462 = vadd.xlane.f32.xlu0 %v461
      %v463 = vpop.xlane.xlu0 %462
      %v464 = vsel %vm457, %v443, 0.0
      %465 = vadd.xlane.f32.xlu0 %v464
      %v466 = vpop.xlane.xlu0 %465
      %v467 = vsel %vm457, %v444, 0.0
      %468 = vadd.xlane.f32.xlu0 %v467
      %v469 = vpop.xlane.xlu0 %468
      %v470 = vsel %vm457, %v445, 0.0
      %471 = vadd.xlane.f32.xlu0 %v470
      %v472 = vpop.xlane.xlu0 %471
      %v473 = vsel %vm457, %v446, 0.0
      %474 = vadd.xlane.f32.xlu0 %v473
      %v475 = vpop.xlane.xlu0 %474
      %v476 = vsel %vm457, %v447, 0.0
      %477 = vadd.xlane.f32.xlu0 %v476
      %v478 = vpop.xlane.xlu0 %477
      %v479 = vsel %vm457, %v448, 0.0
      %480 = vadd.xlane.f32.xlu0 %v479
      %v481 = vpop.xlane.xlu0 %480
      %v482 = vsel %vm457, %v449, 0.0
      %483 = vadd.xlane.f32.xlu0 %v482
      %v484 = vpop.xlane.xlu0 %483
      %v485 = vsel %vm457, %v450, 0.0
      %486 = vadd.xlane.f32.xlu0 %v485
      %v487 = vpop.xlane.xlu0 %486
      %v488 = vsel %vm457, %v451, 0.0
      %489 = vadd.xlane.f32.xlu0 %v488
      %v490 = vpop.xlane.xlu0 %489
      %v491 = vsel %vm457, %v452, 0.0
      %492 = vadd.xlane.f32.xlu0 %v491
      %v493 = vpop.xlane.xlu0 %492
      %v494 = vsel %vm457, %v453, 0.0
      %495 = vadd.xlane.f32.xlu0 %v494
      %v496 = vpop.xlane.xlu0 %495
      %v497 = vsel %vm457, %v454, 0.0
      %498 = vadd.xlane.f32.xlu0 %v497
      %v499 = vpop.xlane.xlu0 %498
      %v500 = vsel %vm457, %v455, 0.0
      %501 = vadd.xlane.f32.xlu0 %v500
      %v502 = vpop.xlane.xlu0 %501
      %v503 = vsel %vm457, %v456, 0.0
      %504 = vadd.xlane.f32.xlu0 %v503
      %v505 = vpop.xlane.xlu0 %504
      %v506 = vmul.f32 %v424, -2.0
      %v507 = vmul.f32 %v425, -2.0
      %v508 = vmul.f32 %v426, -2.0
      %v509 = vmul.f32 %v427, -2.0
      %v510 = vmul.f32 %v428, -2.0
      %v511 = vmul.f32 %v429, -2.0
      %v512 = vmul.f32 %v430, -2.0
      %v513 = vmul.f32 %v431, -2.0
      %v514 = vmul.f32 %v432, -2.0
      %v515 = vmul.f32 %v433, -2.0
      %v516 = vmul.f32 %v434, -2.0
      %v517 = vmul.f32 %v435, -2.0
      %v518 = vmul.f32 %v436, -2.0
      %v519 = vmul.f32 %v437, -2.0
      %v520 = vmul.f32 %v438, -2.0
      %v521 = vmul.f32 %v439, -2.0
      %v523 = vsel %vm457, %v506, 0
      %v526 = vsel %vm457, %v507, 0
      %v529 = vsel %vm457, %v508, 0
      %v532 = vsel %vm457, %v509, 0
      %v535 = vsel %vm457, %v510, 0
      %v538 = vsel %vm457, %v511, 0
      %v541 = vsel %vm457, %v512, 0
      %v544 = vsel %vm457, %v513, 0
      %v547 = vsel %vm457, %v514, 0
      %v550 = vsel %vm457, %v515, 0
      %v553 = vsel %vm457, %v516, 0
      %v556 = vsel %vm457, %v517, 0
      %v559 = vsel %vm457, %v518, 0
      %v562 = vsel %vm457, %v519, 0
      %v565 = vsel %vm457, %v520, 0
      %v568 = vsel %vm457, %v521, 0
      %v571 = vsel %vm457, %v440, 0
      %573 = vmatprep.subr.mxu0 0.0
      %574 = vmatpush1.xpose.msra.mxu0 %v571
      %575 = vmatprep.subr.mxu0 0.0
      %576 = vmatpush1.xpose.msra.mxu0 0.0
      %577 = vmatprep.subr.mxu0 0.0
      %578 = vmatpush1.xpose.msra.mxu0 0.0
      %579 = vmatprep.subr.mxu0 0.0
      %580 = vmatpush1.xpose.msra.mxu0 0.0
      %581 = vmatprep.subr.mxu0 0.0
      %582 = vmatpush1.xpose.msra.mxu0 0.0
      %583 = vmatprep.subr.mxu0 0.0
      %584 = vmatpush1.xpose.msra.mxu0 0.0
      %585 = vmatprep.subr.mxu0 0.0
      %586 = vmatpush1.xpose.msra.mxu0 0.0
      %587 = vmatprep.subr.mxu0 0.0
      %588 = vmatpush1.xpose.msra.mxu0 0.0
      %589 = vmatprep.subr.mxu0 0.0
      %590 = vmatpush1.xpose.msra.mxu0 0.0
      %591 = vmatprep.subr.mxu0 0.0
      %592 = vmatpush1.xpose.msra.mxu0 0.0
      %593 = vmatprep.subr.mxu0 0.0
      %594 = vmatpush1.xpose.msra.mxu0 0.0
      %595 = vmatprep.subr.mxu0 0.0
      %596 = vmatpush1.xpose.msra.mxu0 0.0
      %597 = vmatprep.subr.mxu0 0.0
      %598 = vmatpush1.xpose.msra.mxu0 0.0
      %599 = vmatprep.subr.mxu0 0.0
      %600 = vmatpush1.xpose.msra.mxu0 0.0
      %601 = vmatprep.subr.mxu0 0.0
      %602 = vmatpush1.xpose.msra.mxu0 0.0
      %603 = vmatprep.subr.mxu0 0.0
      %604 = vmatpush1.xpose.msra.mxu0 0.0
      %605 = vmatprep.subr.mxu0 0.0
      %606 = vmatpush1.xpose.msra.mxu0 0.0
      %607 = vmatprep.subr.mxu0 0.0
      %608 = vmatpush1.xpose.msra.mxu0 0.0
      %609 = vmatprep.subr.mxu0 0.0
      %610 = vmatpush1.xpose.msra.mxu0 0.0
      %611 = vmatprep.subr.mxu0 0.0
      %612 = vmatpush1.xpose.msra.mxu0 0.0
      %613 = vmatprep.subr.mxu0 0.0
      %614 = vmatpush1.xpose.msra.mxu0 0.0
      %615 = vmatprep.subr.mxu0 0.0
      %616 = vmatpush1.xpose.msra.mxu0 0.0
      %617 = vmatprep.subr.mxu0 0.0
      %618 = vmatpush1.xpose.msra.mxu0 0.0
      %619 = vmatprep.subr.mxu0 0.0
      %620 = vmatpush1.xpose.msra.mxu0 0.0
      %621 = vmatprep.subr.mxu0 0.0
      %622 = vmatpush1.xpose.msra.mxu0 0.0
      %623 = vmatprep.subr.mxu0 0.0
      %624 = vmatpush1.xpose.msra.mxu0 0.0
      %625 = vmatprep.subr.mxu0 0.0
      %626 = vmatpush1.xpose.msra.mxu0 0.0
      %627 = vmatprep.subr.mxu0 0.0
      %628 = vmatpush1.xpose.msra.mxu0 0.0
      %629 = vmatprep.subr.mxu0 0.0
      %630 = vmatpush1.xpose.msra.mxu0 0.0
      %631 = vmatprep.subr.mxu0 0.0
      %632 = vmatpush1.xpose.msra.mxu0 0.0
      %633 = vmatprep.subr.mxu0 0.0
      %634 = vmatpush1.xpose.msra.mxu0 0.0
      %635 = vmatprep.subr.mxu0 0.0
      %636 = vmatpush1.xpose.msra.mxu0 0.0
      %637 = vmatprep.mubr.f32.mxu0 0.0
      %638 = vmatmul.mubr.f32.gmra.mrb[0].mxu0 %v523
      %v639 = vpop.f32.mrb[0].mxu0
      %v640 = vadd.f32 %v460, %v639
      %v641 = vpop.f32.mrb[0].mxu0
      %642 = vmatprep.mubr.f32.mxu0 0.0
      %643 = vmatmul.mubr.f32.gmra.mrb[0].mxu0 %v526
      %v644 = vpop.f32.mrb[0].mxu0
      %v645 = vadd.f32 %v463, %v644
      %v646 = vpop.f32.mrb[0].mxu0
      %647 = vmatprep.mubr.f32.mxu0 0.0
      %648 = vmatmul.mubr.f32.gmra.mrb[0].mxu0 %v529
      %v649 = vpop.f32.mrb[0].mxu0
      %v650 = vadd.f32 %v466, %v649
      %v651 = vpop.f32.mrb[0].mxu0
      %652 = vmatprep.mubr.f32.mxu0 0.0
      %653 = vmatmul.mubr.f32.gmra.mrb[0].mxu0 %v532
      %v654 = vpop.f32.mrb[0].mxu0
      %v655 = vadd.f32 %v469, %v654
      %v656 = vpop.f32.mrb[0].mxu0
      %657 = vmatprep.mubr.f32.mxu0 0.0
      %658 = vmatmul.mubr.f32.gmra.mrb[0].mxu0 %v535
      %v659 = vpop.f32.mrb[0].mxu0
      %v660 = vadd.f32 %v472, %v659
      %v661 = vpop.f32.mrb[0].mxu0
      %662 = vmatprep.mubr.f32.mxu0 0.0
      %663 = vmatmul.mubr.f32.gmra.mrb[0].mxu0 %v538
      %v664 = vpop.f32.mrb[0].mxu0
      %v665 = vadd.f32 %v475, %v664
      %v666 = vpop.f32.mrb[0].mxu0
      %667 = vmatprep.mubr.f32.mxu0 0.0
      %668 = vmatmul.mubr.f32.gmra.mrb[0].mxu0 %v541
      %v669 = vpop.f32.mrb[0].mxu0
      %v670 = vadd.f32 %v478, %v669
      %v671 = vpop.f32.mrb[0].mxu0
      %672 = vmatprep.mubr.f32.mxu0 0.0
      %673 = vmatmul.mubr.f32.gmra.mrb[0].mxu0 %v544
      %v674 = vpop.f32.mrb[0].mxu0
      %v675 = vadd.f32 %v481, %v674
      %v676 = vpop.f32.mrb[0].mxu0
      %677 = vmatprep.mubr.f32.mxu0 0.0
      %678 = vmatmul.mubr.f32.gmra.mrb[0].mxu0 %v547
      %v679 = vpop.f32.mrb[0].mxu0
      %v680 = vadd.f32 %v484, %v679
      %v681 = vpop.f32.mrb[0].mxu0
      %682 = vmatprep.mubr.f32.mxu0 0.0
      %683 = vmatmul.mubr.f32.gmra.mrb[0].mxu0 %v550
      %v684 = vpop.f32.mrb[0].mxu0
      %v685 = vadd.f32 %v487, %v684
      %v686 = vpop.f32.mrb[0].mxu0
      %687 = vmatprep.mubr.f32.mxu0 0.0
      %688 = vmatmul.mubr.f32.gmra.mrb[0].mxu0 %v553
      %v689 = vpop.f32.mrb[0].mxu0
      %v690 = vadd.f32 %v490, %v689
      %v691 = vpop.f32.mrb[0].mxu0
      %692 = vmatprep.mubr.f32.mxu0 0.0
      %693 = vmatmul.mubr.f32.gmra.mrb[0].mxu0 %v556
      %v694 = vpop.f32.mrb[0].mxu0
      %v695 = vadd.f32 %v493, %v694
      %v696 = vpop.f32.mrb[0].mxu0
      %697 = vmatprep.mubr.f32.mxu0 0.0
      %698 = vmatmul.mubr.f32.gmra.mrb[0].mxu0 %v559
      %v699 = vpop.f32.mrb[0].mxu0
      %v700 = vadd.f32 %v496, %v699
      %v701 = vpop.f32.mrb[0].mxu0
      %702 = vmatprep.mubr.f32.mxu0 0.0
      %703 = vmatmul.mubr.f32.gmra.mrb[0].mxu0 %v562
      %v704 = vpop.f32.mrb[0].mxu0
      %v705 = vadd.f32 %v499, %v704
      %v706 = vpop.f32.mrb[0].mxu0
      %707 = vmatprep.mubr.f32.mxu0 0.0
      %708 = vmatmul.mubr.f32.gmra.mrb[0].mxu0 %v565
      %v709 = vpop.f32.mrb[0].mxu0
      %v710 = vadd.f32 %v502, %v709
      %v711 = vpop.f32.mrb[0].mxu0
      %712 = vmatprep.mubr.f32.mxu0 0.0
      %713 = vmatmul.mubr.f32.gmra.mrb[0].mxu0 %v568
      %v714 = vpop.f32.mrb[0].mxu0
      %v715 = vadd.f32 %v505, %v714
      %v716 = vpop.f32.mrb[0].mxu0
      %717 = vdwg.mxu0
      %v718 = vld [vmem:[%s390] sm:$0x1]
      %v720 = vlaneseq
      %v721 = vshrl.u32 %v720, 7
      %v722 = vsub.s32 0, %v721
      %v723 = vrot.slane %v718, %v722
      %v725 = vadd.f32 %v640, %v723
      %v726 = vadd.f32 %v645, %v723
      %v727 = vadd.f32 %v650, %v723
      %v728 = vadd.f32 %v655, %v723
      %v729 = vadd.f32 %v660, %v723
      %v730 = vadd.f32 %v665, %v723
      %v731 = vadd.f32 %v670, %v723
      %v732 = vadd.f32 %v675, %v723
      %v733 = vadd.f32 %v680, %v723
      %v734 = vadd.f32 %v685, %v723
      %v735 = vadd.f32 %v690, %v723
      %v736 = vadd.f32 %v695, %v723
      %v737 = vadd.f32 %v700, %v723
      %v738 = vadd.f32 %v705, %v723
      %v739 = vadd.f32 %v710, %v723
      %v740 = vadd.f32 %v715, %v723
      %v741 = vmax.f32 %v725, 0.0
      %v742 = vmax.f32 %v726, 0.0
      %v743 = vmax.f32 %v727, 0.0
      %v744 = vmax.f32 %v728, 0.0
      %v745 = vmax.f32 %v729, 0.0
      %v746 = vmax.f32 %v730, 0.0
      %v747 = vmax.f32 %v731, 0.0
      %v748 = vmax.f32 %v732, 0.0
      %v749 = vmax.f32 %v733, 0.0
      %v750 = vmax.f32 %v734, 0.0
      %v751 = vmax.f32 %v735, 0.0
      %v752 = vmax.f32 %v736, 0.0
      %v753 = vmax.f32 %v737, 0.0
      %v754 = vmax.f32 %v738, 0.0
      %v755 = vmax.f32 %v739, 0.0
      %v756 = vmax.f32 %v740, 0.0
      %vm757 = vcmask 64512
      %v758 = vsel %vm757, %v741, inf
      %759 = vmin.xlane.f32.xlu0 %v758
      %v760 = vpop.xlane.xlu0 %759
      %v761 = vsel %vm757, %v742, inf
      %762 = vmin.xlane.f32.xlu0 %v761
      %v763 = vpop.xlane.xlu0 %762
      %v764 = vsel %vm757, %v743, inf
      %765 = vmin.xlane.f32.xlu0 %v764
      %v766 = vpop.xlane.xlu0 %765
      %v767 = vsel %vm757, %v744, inf
      %768 = vmin.xlane.f32.xlu0 %v767
      %v769 = vpop.xlane.xlu0 %768
      %v770 = vsel %vm757, %v745, inf
      %771 = vmin.xlane.f32.xlu0 %v770
      %v772 = vpop.xlane.xlu0 %771
      %v773 = vsel %vm757, %v746, inf
      %774 = vmin.xlane.f32.xlu0 %v773
      %v775 = vpop.xlane.xlu0 %774
      %v776 = vsel %vm757, %v747, inf
      %777 = vmin.xlane.f32.xlu0 %v776
      %v778 = vpop.xlane.xlu0 %777
      %v779 = vsel %vm757, %v748, inf
      %780 = vmin.xlane.f32.xlu0 %v779
      %v781 = vpop.xlane.xlu0 %780
      %v782 = vsel %vm757, %v749, inf
      %783 = vmin.xlane.f32.xlu0 %v782
      %v784 = vpop.xlane.xlu0 %783
      %v785 = vsel %vm757, %v750, inf
      %786 = vmin.xlane.f32.xlu0 %v785
      %v787 = vpop.xlane.xlu0 %786
      %v788 = vsel %vm757, %v751, inf
      %789 = vmin.xlane.f32.xlu0 %v788
      %v790 = vpop.xlane.xlu0 %789
      %v791 = vsel %vm757, %v752, inf
      %792 = vmin.xlane.f32.xlu0 %v791
      %v793 = vpop.xlane.xlu0 %792
      %v794 = vsel %vm757, %v753, inf
      %795 = vmin.xlane.f32.xlu0 %v794
      %v796 = vpop.xlane.xlu0 %795
      %v797 = vsel %vm757, %v754, inf
      %798 = vmin.xlane.f32.xlu0 %v797
      %v799 = vpop.xlane.xlu0 %798
      %v800 = vsel %vm757, %v755, inf
      %801 = vmin.xlane.f32.xlu0 %v800
      %v802 = vpop.xlane.xlu0 %801
      %v803 = vsel %vm757, %v756, inf
      %804 = vmin.xlane.f32.xlu0 %v803
      %v805 = vpop.xlane.xlu0 %804
      %vm806 = vcmp.gt.f32.partialorder %v741, %v760
      %vm807 = vcmp.gt.f32.partialorder %v742, %v763
      %vm808 = vcmp.gt.f32.partialorder %v743, %v766
      %vm809 = vcmp.gt.f32.partialorder %v744, %v769
      %vm810 = vcmp.gt.f32.partialorder %v745, %v772
      %vm811 = vcmp.gt.f32.partialorder %v746, %v775
      %vm812 = vcmp.gt.f32.partialorder %v747, %v778
      %vm813 = vcmp.gt.f32.partialorder %v748, %v781
      %vm814 = vcmp.gt.f32.partialorder %v749, %v784
      %vm815 = vcmp.gt.f32.partialorder %v750, %v787
      %vm816 = vcmp.gt.f32.partialorder %v751, %v790
      %vm817 = vcmp.gt.f32.partialorder %v752, %v793
      %vm818 = vcmp.gt.f32.partialorder %v753, %v796
      %vm819 = vcmp.gt.f32.partialorder %v754, %v799
      %vm820 = vcmp.gt.f32.partialorder %v755, %v802
      %vm821 = vcmp.gt.f32.partialorder %v756, %v805
      %v822 = vsel %vm806, %v741, inf
      %v823 = vsel %vm807, %v742, inf
      %v824 = vsel %vm808, %v743, inf
      %v825 = vsel %vm809, %v744, inf
      %v826 = vsel %vm810, %v745, inf
      %v827 = vsel %vm811, %v746, inf
      %v828 = vsel %vm812, %v747, inf
      %v829 = vsel %vm813, %v748, inf
      %v830 = vsel %vm814, %v749, inf
      %v831 = vsel %vm815, %v750, inf
      %v832 = vsel %vm816, %v751, inf
      %v833 = vsel %vm817, %v752, inf
      %v834 = vsel %vm818, %v753, inf
      %v835 = vsel %vm819, %v754, inf
      %v836 = vsel %vm820, %v755, inf
      %v837 = vsel %vm821, %v756, inf
      %v838 = vsel %vm757, %v822, inf
      %839 = vmin.xlane.f32.xlu0 %v838
      %v840 = vpop.xlane.xlu0 %839
      %v841 = vsel %vm757, %v823, inf
      %842 = vmin.xlane.f32.xlu0 %v841
      %v843 = vpop.xlane.xlu0 %842
      %v844 = vsel %vm757, %v824, inf
      %845 = vmin.xlane.f32.xlu0 %v844
      %v846 = vpop.xlane.xlu0 %845
      %v847 = vsel %vm757, %v825, inf
      %848 = vmin.xlane.f32.xlu0 %v847
      %v849 = vpop.xlane.xlu0 %848
      %v850 = vsel %vm757, %v826, inf
      %851 = vmin.xlane.f32.xlu0 %v850
      %v852 = vpop.xlane.xlu0 %851
      %v853 = vsel %vm757, %v827, inf
      %854 = vmin.xlane.f32.xlu0 %v853
      %v855 = vpop.xlane.xlu0 %854
      %v856 = vsel %vm757, %v828, inf
      %857 = vmin.xlane.f32.xlu0 %v856
      %v858 = vpop.xlane.xlu0 %857
      %v859 = vsel %vm757, %v829, inf
      %860 = vmin.xlane.f32.xlu0 %v859
      %v861 = vpop.xlane.xlu0 %860
      %v862 = vsel %vm757, %v830, inf
      %863 = vmin.xlane.f32.xlu0 %v862
      %v864 = vpop.xlane.xlu0 %863
      %v865 = vsel %vm757, %v831, inf
      %866 = vmin.xlane.f32.xlu0 %v865
      %v867 = vpop.xlane.xlu0 %866
      %v868 = vsel %vm757, %v832, inf
      %869 = vmin.xlane.f32.xlu0 %v868
      %v870 = vpop.xlane.xlu0 %869
      %v871 = vsel %vm757, %v833, inf
      %872 = vmin.xlane.f32.xlu0 %v871
      %v873 = vpop.xlane.xlu0 %872
      %v874 = vsel %vm757, %v834, inf
      %875 = vmin.xlane.f32.xlu0 %v874
      %v876 = vpop.xlane.xlu0 %875
      %v877 = vsel %vm757, %v835, inf
      %878 = vmin.xlane.f32.xlu0 %v877
      %v879 = vpop.xlane.xlu0 %878
      %v880 = vsel %vm757, %v836, inf
      %881 = vmin.xlane.f32.xlu0 %v880
      %v882 = vpop.xlane.xlu0 %881
      %v883 = vsel %vm757, %v837, inf
      %884 = vmin.xlane.f32.xlu0 %v883
      %v885 = vpop.xlane.xlu0 %884
      %vm886 = vcmp.gt.f32.partialorder %v741, %v840
      %vm887 = vcmp.gt.f32.partialorder %v742, %v843
      %vm888 = vcmp.gt.f32.partialorder %v743, %v846
      %vm889 = vcmp.gt.f32.partialorder %v744, %v849
      %vm890 = vcmp.gt.f32.partialorder %v745, %v852
      %vm891 = vcmp.gt.f32.partialorder %v746, %v855
      %vm892 = vcmp.gt.f32.partialorder %v747, %v858
      %vm893 = vcmp.gt.f32.partialorder %v748, %v861
      %vm894 = vcmp.gt.f32.partialorder %v749, %v864
      %vm895 = vcmp.gt.f32.partialorder %v750, %v867
      %vm896 = vcmp.gt.f32.partialorder %v751, %v870
      %vm897 = vcmp.gt.f32.partialorder %v752, %v873
      %vm898 = vcmp.gt.f32.partialorder %v753, %v876
      %vm899 = vcmp.gt.f32.partialorder %v754, %v879
      %vm900 = vcmp.gt.f32.partialorder %v755, %v882
      %vm901 = vcmp.gt.f32.partialorder %v756, %v885
      %v902 = vsel %vm886, %v741, inf
      %v903 = vsel %vm887, %v742, inf
      %v904 = vsel %vm888, %v743, inf
      %v905 = vsel %vm889, %v744, inf
      %v906 = vsel %vm890, %v745, inf
      %v907 = vsel %vm891, %v746, inf
      %v908 = vsel %vm892, %v747, inf
      %v909 = vsel %vm893, %v748, inf
      %v910 = vsel %vm894, %v749, inf
      %v911 = vsel %vm895, %v750, inf
      %v912 = vsel %vm896, %v751, inf
      %v913 = vsel %vm897, %v752, inf
      %v914 = vsel %vm898, %v753, inf
      %v915 = vsel %vm899, %v754, inf
      %v916 = vsel %vm900, %v755, inf
      %v917 = vsel %vm901, %v756, inf
      %v918 = vsel %vm757, %v902, inf
      %919 = vmin.xlane.f32.xlu0 %v918
      %v920 = vpop.xlane.xlu0 %919
      %v921 = vsel %vm757, %v903, inf
      %922 = vmin.xlane.f32.xlu0 %v921
      %v923 = vpop.xlane.xlu0 %922
      %v924 = vsel %vm757, %v904, inf
      %925 = vmin.xlane.f32.xlu0 %v924
      %v926 = vpop.xlane.xlu0 %925
      %v927 = vsel %vm757, %v905, inf
      %928 = vmin.xlane.f32.xlu0 %v927
      %v929 = vpop.xlane.xlu0 %928
      %v930 = vsel %vm757, %v906, inf
      %931 = vmin.xlane.f32.xlu0 %v930
      %v932 = vpop.xlane.xlu0 %931
      %v933 = vsel %vm757, %v907, inf
      %934 = vmin.xlane.f32.xlu0 %v933
      %v935 = vpop.xlane.xlu0 %934
      %v936 = vsel %vm757, %v908, inf
      %937 = vmin.xlane.f32.xlu0 %v936
      %v938 = vpop.xlane.xlu0 %937
      %v939 = vsel %vm757, %v909, inf
      %940 = vmin.xlane.f32.xlu0 %v939
      %v941 = vpop.xlane.xlu0 %940
      %v942 = vsel %vm757, %v910, inf
      %943 = vmin.xlane.f32.xlu0 %v942
      %v944 = vpop.xlane.xlu0 %943
      %v945 = vsel %vm757, %v911, inf
      %946 = vmin.xlane.f32.xlu0 %v945
      %v947 = vpop.xlane.xlu0 %946
      %v948 = vsel %vm757, %v912, inf
      %949 = vmin.xlane.f32.xlu0 %v948
      %v950 = vpop.xlane.xlu0 %949
      %v951 = vsel %vm757, %v913, inf
      %952 = vmin.xlane.f32.xlu0 %v951
      %v953 = vpop.xlane.xlu0 %952
      %v954 = vsel %vm757, %v914, inf
      %955 = vmin.xlane.f32.xlu0 %v954
      %v956 = vpop.xlane.xlu0 %955
      %v957 = vsel %vm757, %v915, inf
      %958 = vmin.xlane.f32.xlu0 %v957
      %v959 = vpop.xlane.xlu0 %958
      %v960 = vsel %vm757, %v916, inf
      %961 = vmin.xlane.f32.xlu0 %v960
      %v962 = vpop.xlane.xlu0 %961
      %v963 = vsel %vm757, %v917, inf
      %964 = vmin.xlane.f32.xlu0 %v963
      %v965 = vpop.xlane.xlu0 %964
      %vm966 = vcmp.le.f32.partialorder %v741, %v920
      %vm967 = vcmp.le.f32.partialorder %v742, %v923
      %vm968 = vcmp.le.f32.partialorder %v743, %v926
      %vm969 = vcmp.le.f32.partialorder %v744, %v929
      %vm970 = vcmp.le.f32.partialorder %v745, %v932
      %vm971 = vcmp.le.f32.partialorder %v746, %v935
      %vm972 = vcmp.le.f32.partialorder %v747, %v938
      %vm973 = vcmp.le.f32.partialorder %v748, %v941
      %vm974 = vcmp.le.f32.partialorder %v749, %v944
      %vm975 = vcmp.le.f32.partialorder %v750, %v947
      %vm976 = vcmp.le.f32.partialorder %v751, %v950
      %vm977 = vcmp.le.f32.partialorder %v752, %v953
      %vm978 = vcmp.le.f32.partialorder %v753, %v956
      %vm979 = vcmp.le.f32.partialorder %v754, %v959
      %vm980 = vcmp.le.f32.partialorder %v755, %v962
      %vm981 = vcmp.le.f32.partialorder %v756, %v965
      %v982 = vadd.f32 %v741, 1e-08
      %v983 = vadd.f32 %v742, 1e-08
      %v984 = vadd.f32 %v743, 1e-08
      %v985 = vadd.f32 %v744, 1e-08
      %v986 = vadd.f32 %v745, 1e-08
      %v987 = vadd.f32 %v746, 1e-08
      %v988 = vadd.f32 %v747, 1e-08
      %v989 = vadd.f32 %v748, 1e-08
      %v990 = vadd.f32 %v749, 1e-08
      %v991 = vadd.f32 %v750, 1e-08
      %v992 = vadd.f32 %v751, 1e-08
      %v993 = vadd.f32 %v752, 1e-08
      %v994 = vadd.f32 %v753, 1e-08
      %v995 = vadd.f32 %v754, 1e-08
      %v996 = vadd.f32 %v755, 1e-08
      %v997 = vadd.f32 %v756, 1e-08
      %v998 = vrcp.pop %v982
      %v999 = vrcp.pop %v983
      %v1000 = vrcp.pop %v984
      %v1001 = vrcp.pop %v985
      %v1002 = vrcp.pop %v986
      %v1003 = vrcp.pop %v987
      %v1004 = vrcp.pop %v988
      %v1005 = vrcp.pop %v989
      %v1006 = vrcp.pop %v990
      %v1007 = vrcp.pop %v991
      %v1008 = vrcp.pop %v992
      %v1009 = vrcp.pop %v993
      %v1010 = vrcp.pop %v994
      %v1011 = vrcp.pop %v995
      %v1012 = vrcp.pop %v996
      %v1013 = vrcp.pop %v997
      %v1014 = vsel %vm966, %v998, 0.0
      %v1015 = vsel %vm967, %v999, 0.0
      %v1016 = vsel %vm968, %v1000, 0.0
      %v1017 = vsel %vm969, %v1001, 0.0
      %v1018 = vsel %vm970, %v1002, 0.0
      %v1019 = vsel %vm971, %v1003, 0.0
      %v1020 = vsel %vm972, %v1004, 0.0
      %v1021 = vsel %vm973, %v1005, 0.0
      %v1022 = vsel %vm974, %v1006, 0.0
      %v1023 = vsel %vm975, %v1007, 0.0
      %v1024 = vsel %vm976, %v1008, 0.0
      %v1025 = vsel %vm977, %v1009, 0.0
      %v1026 = vsel %vm978, %v1010, 0.0
      %v1027 = vsel %vm979, %v1011, 0.0
      %v1028 = vsel %vm980, %v1012, 0.0
      %v1029 = vsel %vm981, %v1013, 0.0
      %v1030 = vsel %vm757, %v1014, 0.0
      %1031 = vadd.xlane.f32.xlu0 %v1030
      %v1032 = vpop.xlane.xlu0 %1031
      %v1033 = vsel %vm757, %v1015, 0.0
      %1034 = vadd.xlane.f32.xlu0 %v1033
      %v1035 = vpop.xlane.xlu0 %1034
      %v1036 = vsel %vm757, %v1016, 0.0
      %1037 = vadd.xlane.f32.xlu0 %v1036
      %v1038 = vpop.xlane.xlu0 %1037
      %v1039 = vsel %vm757, %v1017, 0.0
      %1040 = vadd.xlane.f32.xlu0 %v1039
      %v1041 = vpop.xlane.xlu0 %1040
      %v1042 = vsel %vm757, %v1018, 0.0
      %1043 = vadd.xlane.f32.xlu0 %v1042
      %v1044 = vpop.xlane.xlu0 %1043
      %v1045 = vsel %vm757, %v1019, 0.0
      %1046 = vadd.xlane.f32.xlu0 %v1045
      %v1047 = vpop.xlane.xlu0 %1046
      %v1048 = vsel %vm757, %v1020, 0.0
      %1049 = vadd.xlane.f32.xlu0 %v1048
      %v1050 = vpop.xlane.xlu0 %1049
      %v1051 = vsel %vm757, %v1021, 0.0
      %1052 = vadd.xlane.f32.xlu0 %v1051
      %v1053 = vpop.xlane.xlu0 %1052
      %v1054 = vsel %vm757, %v1022, 0.0
      %1055 = vadd.xlane.f32.xlu0 %v1054
      %v1056 = vpop.xlane.xlu0 %1055
      %v1057 = vsel %vm757, %v1023, 0.0
      %1058 = vadd.xlane.f32.xlu0 %v1057
      %v1059 = vpop.xlane.xlu0 %1058
      %v1060 = vsel %vm757, %v1024, 0.0
      %1061 = vadd.xlane.f32.xlu0 %v1060
      %v1062 = vpop.xlane.xlu0 %1061
      %v1063 = vsel %vm757, %v1025, 0.0
      %1064 = vadd.xlane.f32.xlu0 %v1063
      %v1065 = vpop.xlane.xlu0 %1064
      %v1066 = vsel %vm757, %v1026, 0.0
      %1067 = vadd.xlane.f32.xlu0 %v1066
      %v1068 = vpop.xlane.xlu0 %1067
      %v1069 = vsel %vm757, %v1027, 0.0
      %1070 = vadd.xlane.f32.xlu0 %v1069
      %v1071 = vpop.xlane.xlu0 %1070
      %v1072 = vsel %vm757, %v1028, 0.0
      %1073 = vadd.xlane.f32.xlu0 %v1072
      %v1074 = vpop.xlane.xlu0 %1073
      %v1075 = vsel %vm757, %v1029, 0.0
      %1076 = vadd.xlane.f32.xlu0 %v1075
      %v1077 = vpop.xlane.xlu0 %1076
      %v1078 = vrcp.pop %v1032
      %v1079 = vrcp.pop %v1035
      %v1080 = vrcp.pop %v1038
      %v1081 = vrcp.pop %v1041
      %v1082 = vrcp.pop %v1044
      %v1083 = vrcp.pop %v1047
      %v1084 = vrcp.pop %v1050
      %v1085 = vrcp.pop %v1053
      %v1086 = vrcp.pop %v1056
      %v1087 = vrcp.pop %v1059
      %v1088 = vrcp.pop %v1062
      %v1089 = vrcp.pop %v1065
      %v1090 = vrcp.pop %v1068
      %v1091 = vrcp.pop %v1071
      %v1092 = vrcp.pop %v1074
      %v1093 = vrcp.pop %v1077
      %v1094 = vmul.f32 %v1014, %v1078
      %v1095 = vmul.f32 %v1015, %v1079
      %v1096 = vmul.f32 %v1016, %v1080
      %v1097 = vmul.f32 %v1017, %v1081
      %v1098 = vmul.f32 %v1018, %v1082
      %v1099 = vmul.f32 %v1019, %v1083
      %v1100 = vmul.f32 %v1020, %v1084
      %v1101 = vmul.f32 %v1021, %v1085
      %v1102 = vmul.f32 %v1022, %v1086
      %v1103 = vmul.f32 %v1023, %v1087
      %v1104 = vmul.f32 %v1024, %v1088
      %v1105 = vmul.f32 %v1025, %v1089
      %v1106 = vmul.f32 %v1026, %v1090
      %v1107 = vmul.f32 %v1027, %v1091
      %v1108 = vmul.f32 %v1028, %v1092
      %v1109 = vmul.f32 %v1029, %v1093
      %v1110 = vpack.c.bf16 %v1095, %v1094
      %v1111 = vpack.c.bf16 %v1097, %v1096
      %v1112 = vpack.c.bf16 %v1099, %v1098
      %v1113 = vpack.c.bf16 %v1101, %v1100
      %v1114 = vpack.c.bf16 %v1103, %v1102
      %v1115 = vpack.c.bf16 %v1105, %v1104
      %v1116 = vpack.c.bf16 %v1107, %v1106
      %v1117 = vpack.c.bf16 %v1109, %v1108
      %v1118 = vld [vmem:[%s404] sm:$0xf]
      %v1119 = vld [vmem:[%s399] sm:$0xf]
      %v1120 = vld [vmem:[%s399 + $0x4] sm:$0xf]
      %v1121 = vld [vmem:[%s399 + $0x8] sm:$0xf]
      %v1122 = vld [vmem:[%s399 + $0xc] sm:$0xf]
      %v1123 = vld [vmem:[%s399 + $0x10] sm:$0xf]
      %v1124 = vld [vmem:[%s399 + $0x14] sm:$0xf]
      %v1125 = vld [vmem:[%s399 + $0x18] sm:$0xf]
      %v1126 = vld [vmem:[%s399 + $0x1c] sm:$0xf]
      %v1127 = vld [vmem:[%s399 + $0x20] sm:$0xf]
      %v1128 = vld [vmem:[%s399 + $0x24] sm:$0xf]
      %v1129 = vld [vmem:[%s399 + $0x28] sm:$0xf]
      %v1130 = vld [vmem:[%s399 + $0x2c] sm:$0xf]
      %v1131 = vld [vmem:[%s399 + $0x30] sm:$0xf]
      %v1132 = vld [vmem:[%s399 + $0x34] sm:$0xf]
      %v1133 = vld [vmem:[%s399 + $0x38] sm:$0xf]
      %v1134 = vld [vmem:[%s399 + $0x3c] sm:$0xf]
      %v1135 = vld [vmem:[%s5] sm:$0xf]
      %v1136 = vld [vmem:[%s5 + $0x4] sm:$0xf]
      %v1153 = vunpack.c.l.b16 %v1119
      %v1154 = vunpack.c.l.b16 %v1120
      %v1155 = vunpack.c.l.b16 %v1121
      %v1156 = vunpack.c.l.b16 %v1122
      %v1157 = vunpack.c.l.b16 %v1123
      %v1158 = vunpack.c.l.b16 %v1124
      %v1159 = vunpack.c.l.b16 %v1125
      %v1160 = vunpack.c.l.b16 %v1126
      %v1161 = vunpack.c.l.b16 %v1127
      %v1162 = vunpack.c.l.b16 %v1128
      %v1163 = vunpack.c.l.b16 %v1129
      %v1164 = vunpack.c.l.b16 %v1130
      %v1165 = vunpack.c.l.b16 %v1131
      %v1166 = vunpack.c.l.b16 %v1132
      %v1167 = vunpack.c.l.b16 %v1133
      %v1168 = vunpack.c.l.b16 %v1134
      %v1169 = vpack.c.b16 %v1154, %v1153
      %v1170 = vpack.c.b16 %v1156, %v1155
      %v1171 = vpack.c.b16 %v1158, %v1157
      %v1172 = vpack.c.b16 %v1160, %v1159
      %v1173 = vpack.c.b16 %v1162, %v1161
      %v1174 = vpack.c.b16 %v1164, %v1163
      %v1175 = vpack.c.b16 %v1166, %v1165
      %v1176 = vpack.c.b16 %v1168, %v1167
      %v1179 = vunpack.c.l.b16 %v1135
      %v1180 = vunpack.c.l.b16 %v1136
      %v1181 = vpack.c.b16 %v1180, %v1179
      %vm1183 = vcmask 130048
      %v1185 = vsel %vm1183, %v1169, 0
      %v1188 = vsel %vm1183, %v1170, 0
      %v1191 = vsel %vm1183, %v1171, 0
      %v1194 = vsel %vm1183, %v1172, 0
      %v1197 = vsel %vm1183, %v1173, 0
      %v1200 = vsel %vm1183, %v1174, 0
      %v1203 = vsel %vm1183, %v1175, 0
      %v1206 = vsel %vm1183, %v1176, 0
      %1208 = vmatprep.subr.bf16.mxu0 0
      %1209 = vmatpush1.bf16.msra.mxu0 %v1181
      %1210 = vmatprep.subr.bf16.mxu0 0
      %1211 = vmatpush1.bf16.msra.mxu0 0
      %1212 = vmatprep.subr.bf16.mxu0 0
      %1213 = vmatpush1.bf16.msra.mxu0 0
      %1214 = vmatprep.subr.bf16.mxu0 0
      %1215 = vmatpush1.bf16.msra.mxu0 0
      %1216 = vmatprep.subr.bf16.mxu0 0
      %1217 = vmatpush1.bf16.msra.mxu0 0
      %1218 = vmatprep.subr.bf16.mxu0 0
      %1219 = vmatpush1.bf16.msra.mxu0 0
      %1220 = vmatprep.subr.bf16.mxu0 0
      %1221 = vmatpush1.bf16.msra.mxu0 0
      %1222 = vmatprep.subr.bf16.mxu0 0
      %1223 = vmatpush1.bf16.msra.mxu0 0
      %1224 = vmatprep.subr.bf16.mxu0 0
      %1225 = vmatpush1.bf16.msra.mxu0 0
      %1226 = vmatprep.subr.bf16.mxu0 0
      %1227 = vmatpush1.bf16.msra.mxu0 0
      %1228 = vmatprep.subr.bf16.mxu0 0
      %1229 = vmatpush1.bf16.msra.mxu0 0
      %1230 = vmatprep.subr.bf16.mxu0 0
      %1231 = vmatpush1.bf16.msra.mxu0 0
      %1232 = vmatprep.subr.bf16.mxu0 0
      %1233 = vmatpush1.bf16.msra.mxu0 0
      %1234 = vmatprep.subr.bf16.mxu0 0
      %1235 = vmatpush1.bf16.msra.mxu0 0
      %1236 = vmatprep.subr.bf16.mxu0 0
      %1237 = vmatpush1.bf16.msra.mxu0 0
      %1238 = vmatprep.subr.bf16.mxu0 0
      %1239 = vmatpush1.bf16.msra.mxu0 0
      %1240 = vmatprep.mubr.bf16.mxu0 0
      %1241 = vmatmul.mubr.bf16.gmra.mrb[0].mxu0 %v1185
      %v1242 = vpop.f32.mrb[0].mxu0
      %v1243 = vadd.f32 0.0, %v1242
      %v1244 = vpop.f32.mrb[0].mxu0
      %v1245 = vpop.f32.mrb[0].mxu0
      %v1246 = vadd.f32 0.0, %v1245
      %v1247 = vpop.f32.mrb[0].mxu0
      %1248 = vmatprep.mubr.bf16.mxu0 0
      %1249 = vmatmul.mubr.bf16.gmra.mrb[0].mxu0 %v1188
      %v1250 = vpop.f32.mrb[0].mxu0
      %v1251 = vadd.f32 0.0, %v1250
      %v1252 = vpop.f32.mrb[0].mxu0
      %v1253 = vpop.f32.mrb[0].mxu0
      %v1254 = vadd.f32 0.0, %v1253
      %v1255 = vpop.f32.mrb[0].mxu0
      %1256 = vmatprep.mubr.bf16.mxu0 0
      %1257 = vmatmul.mubr.bf16.gmra.mrb[0].mxu0 %v1191
      %v1258 = vpop.f32.mrb[0].mxu0
      %v1259 = vadd.f32 0.0, %v1258
      %v1260 = vpop.f32.mrb[0].mxu0
      %v1261 = vpop.f32.mrb[0].mxu0
      %v1262 = vadd.f32 0.0, %v1261
      %v1263 = vpop.f32.mrb[0].mxu0
      %1264 = vmatprep.mubr.bf16.mxu0 0
      %1265 = vmatmul.mubr.bf16.gmra.mrb[0].mxu0 %v1194
      %v1266 = vpop.f32.mrb[0].mxu0
      %v1267 = vadd.f32 0.0, %v1266
      %v1268 = vpop.f32.mrb[0].mxu0
      %v1269 = vpop.f32.mrb[0].mxu0
      %v1270 = vadd.f32 0.0, %v1269
      %v1271 = vpop.f32.mrb[0].mxu0
      %1272 = vmatprep.mubr.bf16.mxu0 0
      %1273 = vmatmul.mubr.bf16.gmra.mrb[0].mxu0 %v1197
      %v1274 = vpop.f32.mrb[0].mxu0
      %v1275 = vadd.f32 0.0, %v1274
      %v1276 = vpop.f32.mrb[0].mxu0
      %v1277 = vpop.f32.mrb[0].mxu0
      %v1278 = vadd.f32 0.0, %v1277
      %v1279 = vpop.f32.mrb[0].mxu0
      %1280 = vmatprep.mubr.bf16.mxu0 0
      %1281 = vmatmul.mubr.bf16.gmra.mrb[0].mxu0 %v1200
      %v1282 = vpop.f32.mrb[0].mxu0
      %v1283 = vadd.f32 0.0, %v1282
      %v1284 = vpop.f32.mrb[0].mxu0
      %v1285 = vpop.f32.mrb[0].mxu0
      %v1286 = vadd.f32 0.0, %v1285
      %v1287 = vpop.f32.mrb[0].mxu0
      %1288 = vmatprep.mubr.bf16.mxu0 0
      %1289 = vmatmul.mubr.bf16.gmra.mrb[0].mxu0 %v1203
      %v1290 = vpop.f32.mrb[0].mxu0
      %v1291 = vadd.f32 0.0, %v1290
      %v1292 = vpop.f32.mrb[0].mxu0
      %v1293 = vpop.f32.mrb[0].mxu0
      %v1294 = vadd.f32 0.0, %v1293
      %v1295 = vpop.f32.mrb[0].mxu0
      %1296 = vmatprep.mubr.bf16.mxu0 0
      %1297 = vmatmul.mubr.bf16.gmra.mrb[0].mxu0 %v1206
      %v1298 = vpop.f32.mrb[0].mxu0
      %v1299 = vadd.f32 0.0, %v1298
      %v1300 = vpop.f32.mrb[0].mxu0
      %v1301 = vpop.f32.mrb[0].mxu0
      %v1302 = vadd.f32 0.0, %v1301
      %v1303 = vpop.f32.mrb[0].mxu0
      %1304 = vdwg.mxu0
      %v1306 = vsel %vm757, %v1110, 0
      %v1309 = vsel %vm757, %v1111, 0
      %v1312 = vsel %vm757, %v1112, 0
      %v1315 = vsel %vm757, %v1113, 0
      %v1318 = vsel %vm757, %v1114, 0
      %v1321 = vsel %vm757, %v1115, 0
      %v1324 = vsel %vm757, %v1116, 0
      %v1327 = vsel %vm757, %v1117, 0
      %vm1329 = vcmask 1043456
      %v1331 = vsel %vm1329, %v1118, 0
      %1333 = vmatprep.subr.bf16.mxu0 0
      %1334 = vmatpush1.bf16.msra.mxu0 %v1331
      %1335 = vmatprep.subr.bf16.mxu0 0
      %1336 = vmatpush1.bf16.msra.mxu0 0
      %1337 = vmatprep.subr.bf16.mxu0 0
      %1338 = vmatpush1.bf16.msra.mxu0 0
      %1339 = vmatprep.subr.bf16.mxu0 0
      %1340 = vmatpush1.bf16.msra.mxu0 0
      %1341 = vmatprep.subr.bf16.mxu0 0
      %1342 = vmatpush1.bf16.msra.mxu0 0
      %1343 = vmatprep.subr.bf16.mxu0 0
      %1344 = vmatpush1.bf16.msra.mxu0 0
      %1345 = vmatprep.subr.bf16.mxu0 0
      %1346 = vmatpush1.bf16.msra.mxu0 0
      %1347 = vmatprep.subr.bf16.mxu0 0
      %1348 = vmatpush1.bf16.msra.mxu0 0
      %1349 = vmatprep.subr.bf16.mxu0 0
      %1350 = vmatpush1.bf16.msra.mxu0 0
      %1351 = vmatprep.subr.bf16.mxu0 0
      %1352 = vmatpush1.bf16.msra.mxu0 0
      %1353 = vmatprep.subr.bf16.mxu0 0
      %1354 = vmatpush1.bf16.msra.mxu0 0
      %1355 = vmatprep.subr.bf16.mxu0 0
      %1356 = vmatpush1.bf16.msra.mxu0 0
      %1357 = vmatprep.subr.bf16.mxu0 0
      %1358 = vmatpush1.bf16.msra.mxu0 0
      %1359 = vmatprep.subr.bf16.mxu0 0
      %1360 = vmatpush1.bf16.msra.mxu0 0
      %1361 = vmatprep.subr.bf16.mxu0 0
      %1362 = vmatpush1.bf16.msra.mxu0 0
      %1363 = vmatprep.subr.bf16.mxu0 0
      %1364 = vmatpush1.bf16.msra.mxu0 0
      %1365 = vmatprep.mubr.bf16.mxu0 0
      %1366 = vmatmul.mubr.bf16.gmra.mrb[0].mxu0 %v1306
      %v1367 = vpop.f32.mrb[0].mxu0
      %v1368 = vadd.f32 %v1243, %v1367
      %v1369 = vpop.f32.mrb[0].mxu0
      %v1370 = vpop.f32.mrb[0].mxu0
      %v1371 = vadd.f32 %v1246, %v1370
      %v1372 = vpop.f32.mrb[0].mxu0
      %1373 = vmatprep.mubr.bf16.mxu0 0
      %1374 = vmatmul.mubr.bf16.gmra.mrb[0].mxu0 %v1309
      %v1375 = vpop.f32.mrb[0].mxu0
      %v1376 = vadd.f32 %v1251, %v1375
      %v1377 = vpop.f32.mrb[0].mxu0
      %v1378 = vpop.f32.mrb[0].mxu0
      %v1379 = vadd.f32 %v1254, %v1378
      %v1380 = vpop.f32.mrb[0].mxu0
      %1381 = vmatprep.mubr.bf16.mxu0 0
      %1382 = vmatmul.mubr.bf16.gmra.mrb[0].mxu0 %v1312
      %v1383 = vpop.f32.mrb[0].mxu0
      %v1384 = vadd.f32 %v1259, %v1383
      %v1385 = vpop.f32.mrb[0].mxu0
      %v1386 = vpop.f32.mrb[0].mxu0
      %v1387 = vadd.f32 %v1262, %v1386
      %v1388 = vpop.f32.mrb[0].mxu0
      %1389 = vmatprep.mubr.bf16.mxu0 0
      %1390 = vmatmul.mubr.bf16.gmra.mrb[0].mxu0 %v1315
      %v1391 = vpop.f32.mrb[0].mxu0
      %v1392 = vadd.f32 %v1267, %v1391
      %v1393 = vpop.f32.mrb[0].mxu0
      %v1394 = vpop.f32.mrb[0].mxu0
      %v1395 = vadd.f32 %v1270, %v1394
      %v1396 = vpop.f32.mrb[0].mxu0
      %1397 = vmatprep.mubr.bf16.mxu0 0
      %1398 = vmatmul.mubr.bf16.gmra.mrb[0].mxu0 %v1318
      %v1399 = vpop.f32.mrb[0].mxu0
      %v1400 = vadd.f32 %v1275, %v1399
      %v1401 = vpop.f32.mrb[0].mxu0
      %v1402 = vpop.f32.mrb[0].mxu0
      %v1403 = vadd.f32 %v1278, %v1402
      %v1404 = vpop.f32.mrb[0].mxu0
      %1405 = vmatprep.mubr.bf16.mxu0 0
      %1406 = vmatmul.mubr.bf16.gmra.mrb[0].mxu0 %v1321
      %v1407 = vpop.f32.mrb[0].mxu0
      %v1408 = vadd.f32 %v1283, %v1407
      %v1409 = vpop.f32.mrb[0].mxu0
      %v1410 = vpop.f32.mrb[0].mxu0
      %v1411 = vadd.f32 %v1286, %v1410
      %v1412 = vpop.f32.mrb[0].mxu0
      %1413 = vmatprep.mubr.bf16.mxu0 0
      %1414 = vmatmul.mubr.bf16.gmra.mrb[0].mxu0 %v1324
      %v1415 = vpop.f32.mrb[0].mxu0
      %v1416 = vadd.f32 %v1291, %v1415
      %v1417 = vpop.f32.mrb[0].mxu0
      %v1418 = vpop.f32.mrb[0].mxu0
      %v1419 = vadd.f32 %v1294, %v1418
      %v1420 = vpop.f32.mrb[0].mxu0
      %1421 = vmatprep.mubr.bf16.mxu0 0
      %1422 = vmatmul.mubr.bf16.gmra.mrb[0].mxu0 %v1327
      %v1423 = vpop.f32.mrb[0].mxu0
      %v1424 = vadd.f32 %v1299, %v1423
      %v1425 = vpop.f32.mrb[0].mxu0
      %v1426 = vpop.f32.mrb[0].mxu0
      %v1427 = vadd.f32 %v1302, %v1426
      %v1428 = vpop.f32.mrb[0].mxu0
      %1429 = vdwg.mxu0
      %vm1430 = vcmask 523264
      %1431 = vst.msk [vmem:[%s413] sm:$0xff] %vm1430, %v1368
      %1432 = vst.msk [vmem:[%s413 + $0x8] sm:$0xff] %vm1430, %v1371
      %1433 = vst.msk [vmem:[%s413 + $0x10] sm:$0xff] %vm1430, %v1376
      %1434 = vst.msk [vmem:[%s413 + $0x18] sm:$0xff] %vm1430, %v1379
      %1435 = vst.msk [vmem:[%s413 + $0x20] sm:$0xff] %vm1430, %v1384
      %1436 = vst.msk [vmem:[%s413 + $0x28] sm:$0xff] %vm1430, %v1387
      %1437 = vst.msk [vmem:[%s413 + $0x30] sm:$0xff] %vm1430, %v1392
      %1438 = vst.msk [vmem:[%s413 + $0x38] sm:$0xff] %vm1430, %v1395
      %1439 = vst.msk [vmem:[%s413 + $0x40] sm:$0xff] %vm1430, %v1400
      %1440 = vst.msk [vmem:[%s413 + $0x48] sm:$0xff] %vm1430, %v1403
      %1441 = vst.msk [vmem:[%s413 + $0x50] sm:$0xff] %vm1430, %v1408
      %1442 = vst.msk [vmem:[%s413 + $0x58] sm:$0xff] %vm1430, %v1411
      %1443 = vst.msk [vmem:[%s413 + $0x60] sm:$0xff] %vm1430, %v1416
      %1444 = vst.msk [vmem:[%s413 + $0x68] sm:$0xff] %vm1430, %v1419
      %1445 = vst.msk [vmem:[%s413 + $0x70] sm:$0xff] %vm1430, %v1424
      %1446 = vst.msk [vmem:[%s413 + $0x78] sm:$0xff] %vm1430, %v1427
      %1447 = vmatprep.subr.mxu0 0.0
      %1448 = vmatpush1.msra.mxu0 %v1368
      %1449 = vmatprep.subr.mxu0 0.0
      %1450 = vmatpush1.msra.mxu0 %v1371
      %1451 = vmatprep.subr.mxu0 0.0
      %1452 = vmatpush1.msra.mxu0 %v1376
      %1453 = vmatprep.subr.mxu0 0.0
      %1454 = vmatpush1.msra.mxu0 %v1379
      %1455 = vmatprep.subr.mxu0 0.0
      %1456 = vmatpush1.msra.mxu0 %v1384
      %1457 = vmatprep.subr.mxu0 0.0
      %1458 = vmatpush1.msra.mxu0 %v1387
      %1459 = vmatprep.subr.mxu0 0.0
      %1460 = vmatpush1.msra.mxu0 %v1392
      %1461 = vmatprep.subr.mxu0 0.0
      %1462 = vmatpush1.msra.mxu0 %v1395
      %1463 = vmatprep.subr.mxu0 0.0
      %1464 = vmatpush1.msra.mxu0 %v1400
      %1465 = vmatprep.subr.mxu0 0.0
      %1466 = vmatpush1.msra.mxu0 %v1403
      %1467 = vmatprep.subr.mxu0 0.0
      %1468 = vmatpush1.msra.mxu0 %v1408
      %1469 = vmatprep.subr.mxu0 0.0
      %1470 = vmatpush1.msra.mxu0 %v1411
      %1471 = vmatprep.subr.mxu0 0.0
      %1472 = vmatpush1.msra.mxu0 %v1416
      %1473 = vmatprep.subr.mxu0 0.0
      %1474 = vmatpush1.msra.mxu0 %v1419
      %1475 = vmatprep.subr.mxu0 0.0
      %1476 = vmatpush1.msra.mxu0 %v1424
      %1477 = vmatprep.subr.mxu0 0.0
      %1478 = vmatpush1.msra.mxu0 %v1427
      %1479 = vmatprep.subr.mxu0 0.0
      %1480 = vmatpush1.msra.mxu0 0.0
      %1481 = vmatprep.subr.mxu0 0.0
      %1482 = vmatpush1.msra.mxu0 0.0
      %1483 = vmatprep.subr.mxu0 0.0
      %1484 = vmatpush1.msra.mxu0 0.0
      %1485 = vmatprep.subr.mxu0 0.0
      %1486 = vmatpush1.msra.mxu0 0.0
      %1487 = vmatprep.subr.mxu0 0.0
      %1488 = vmatpush1.msra.mxu0 0.0
      %1489 = vmatprep.subr.mxu0 0.0
      %1490 = vmatpush1.msra.mxu0 0.0
      %1491 = vmatprep.subr.mxu0 0.0
      %1492 = vmatpush1.msra.mxu0 0.0
      %1493 = vmatprep.subr.mxu0 0.0
      %1494 = vmatpush1.msra.mxu0 0.0
      %1495 = vmatprep.subr.mxu0 0.0
      %1496 = vmatpush1.msra.mxu0 0.0
      %1497 = vmatprep.subr.mxu0 0.0
      %1498 = vmatpush1.msra.mxu0 0.0
      %1499 = vmatprep.subr.mxu0 0.0
      %1500 = vmatpush1.msra.mxu0 0.0
      %1501 = vmatprep.subr.mxu0 0.0
      %1502 = vmatpush1.msra.mxu0 0.0
      %1503 = vmatprep.subr.mxu0 0.0
      %1504 = vmatpush1.msra.mxu0 0.0
      %1505 = vmatprep.subr.mxu0 0.0
      %1506 = vmatpush1.msra.mxu0 0.0
      %1507 = vmatprep.subr.mxu0 0.0
      %1508 = vmatpush1.msra.mxu0 0.0
      %1509 = vmatprep.subr.mxu0 0.0
      %1510 = vmatpush1.msra.mxu0 0.0
      %1511 = vmatprep.mubr.f32.mxu0 0.0
      %1512 = vmatmul.mubr.f32.gmra.mrb[0].mxu0 1.0
      %v1513 = vpop.f32.mrb[0].mxu0
      %v1514 = vadd.f32 0.0, %v1513
      %v1515 = vpop.f32.mrb[0].mxu0
      %1516 = vdwg.mxu0
      %vm1517 = vcmask 516096
      %1518 = vst.msk [vmem:[%s422] sm:$0x1] %vm1517, %v1514
      %v1519 = vmul.f32 %v1368, %v1368
      %v1520 = vmul.f32 %v1371, %v1371
      %v1521 = vmul.f32 %v1376, %v1376
      %v1522 = vmul.f32 %v1379, %v1379
      %v1523 = vmul.f32 %v1384, %v1384
      %v1524 = vmul.f32 %v1387, %v1387
      %v1525 = vmul.f32 %v1392, %v1392
      %v1526 = vmul.f32 %v1395, %v1395
      %v1527 = vmul.f32 %v1400, %v1400
      %v1528 = vmul.f32 %v1403, %v1403
      %v1529 = vmul.f32 %v1408, %v1408
      %v1530 = vmul.f32 %v1411, %v1411
      %v1531 = vmul.f32 %v1416, %v1416
      %v1532 = vmul.f32 %v1419, %v1419
      %v1533 = vmul.f32 %v1424, %v1424
      %v1534 = vmul.f32 %v1427, %v1427
      %1535 = vmatprep.subr.mxu0 0.0
      %1536 = vmatpush1.msra.mxu0 %v1519
      %1537 = vmatprep.subr.mxu0 0.0
      %1538 = vmatpush1.msra.mxu0 %v1520
      %1539 = vmatprep.subr.mxu0 0.0
      %1540 = vmatpush1.msra.mxu0 %v1521
      %1541 = vmatprep.subr.mxu0 0.0
      %1542 = vmatpush1.msra.mxu0 %v1522
      %1543 = vmatprep.subr.mxu0 0.0
      %1544 = vmatpush1.msra.mxu0 %v1523
      %1545 = vmatprep.subr.mxu0 0.0
      %1546 = vmatpush1.msra.mxu0 %v1524
      %1547 = vmatprep.subr.mxu0 0.0
      %1548 = vmatpush1.msra.mxu0 %v1525
      %1549 = vmatprep.subr.mxu0 0.0
      %1550 = vmatpush1.msra.mxu0 %v1526
      %1551 = vmatprep.subr.mxu0 0.0
      %1552 = vmatpush1.msra.mxu0 %v1527
      %1553 = vmatprep.subr.mxu0 0.0
      %1554 = vmatpush1.msra.mxu0 %v1528
      %1555 = vmatprep.subr.mxu0 0.0
      %1556 = vmatpush1.msra.mxu0 %v1529
      %1557 = vmatprep.subr.mxu0 0.0
      %1558 = vmatpush1.msra.mxu0 %v1530
      %1559 = vmatprep.subr.mxu0 0.0
      %1560 = vmatpush1.msra.mxu0 %v1531
      %1561 = vmatprep.subr.mxu0 0.0
      %1562 = vmatpush1.msra.mxu0 %v1532
      %1563 = vmatprep.subr.mxu0 0.0
      %1564 = vmatpush1.msra.mxu0 %v1533
      %1565 = vmatprep.subr.mxu0 0.0
      %1566 = vmatpush1.msra.mxu0 %v1534
      %1567 = vmatprep.subr.mxu0 0.0
      %1568 = vmatpush1.msra.mxu0 0.0
      %1569 = vmatprep.subr.mxu0 0.0
      %1570 = vmatpush1.msra.mxu0 0.0
      %1571 = vmatprep.subr.mxu0 0.0
      %1572 = vmatpush1.msra.mxu0 0.0
      %1573 = vmatprep.subr.mxu0 0.0
      %1574 = vmatpush1.msra.mxu0 0.0
      %1575 = vmatprep.subr.mxu0 0.0
      %1576 = vmatpush1.msra.mxu0 0.0
      %1577 = vmatprep.subr.mxu0 0.0
      %1578 = vmatpush1.msra.mxu0 0.0
      %1579 = vmatprep.subr.mxu0 0.0
      %1580 = vmatpush1.msra.mxu0 0.0
      %1581 = vmatprep.subr.mxu0 0.0
      %1582 = vmatpush1.msra.mxu0 0.0
      %1583 = vmatprep.subr.mxu0 0.0
      %1584 = vmatpush1.msra.mxu0 0.0
      %1585 = vmatprep.subr.mxu0 0.0
      %1586 = vmatpush1.msra.mxu0 0.0
      %1587 = vmatprep.subr.mxu0 0.0
      %1588 = vmatpush1.msra.mxu0 0.0
      %1589 = vmatprep.subr.mxu0 0.0
      %1590 = vmatpush1.msra.mxu0 0.0
      %1591 = vmatprep.subr.mxu0 0.0
      %1592 = vmatpush1.msra.mxu0 0.0
      %1593 = vmatprep.subr.mxu0 0.0
      %1594 = vmatpush1.msra.mxu0 0.0
      %1595 = vmatprep.subr.mxu0 0.0
      %1596 = vmatpush1.msra.mxu0 0.0
      %1597 = vmatprep.subr.mxu0 0.0
      %1598 = vmatpush1.msra.mxu0 0.0
      %1599 = vmatprep.mubr.f32.mxu0 0.0
      %1600 = vmatmul.mubr.f32.gmra.mrb[0].mxu0 1.0
      %v1601 = vpop.f32.mrb[0].mxu0
      %v1602 = vadd.f32 0.0, %v1601
      %v1603 = vpop.f32.mrb[0].mxu0
      %1604 = vdwg.mxu0
      %1605 = vst.msk [vmem:[%s422 + $0x1] sm:$0x1] %vm1517, %v1602
      %s1606 = smul.u32 16, %s24
      %p1607 = scmp.lt.s32.totalorder %s23, 1
      %s1608 = scalar_select %p1607, %s23, 1
      %p1609 = scmp.lt.s32.totalorder %s1606, 31
      %s1610 = scalar_select %p1609, %s1606, 31
      %s1611 = smul.addr %s1608, 32
      %s1612 = sadd.s32 %s1610, %s1611
      %s1613 = smul.addr %s1612, 8
      %s1614 = scalar_lea.vmem %s6, %s1613
      %p1615 = scmp.lt.s32.totalorder %s23, 1
      %s1616 = scalar_select %p1615, %s23, 1
      %p1617 = scmp.lt.s32.totalorder %s24, 1
      %s1618 = scalar_select %p1617, %s24, 1
      %s1619 = smul.addr %s1616, 2
      %s1620 = sadd.s32 %s1618, %s1619
      %s1621 = smul.addr %s1620, 2
      %s1622 = scalar_lea.vmem %s7, %s1621
      // Predicated region
      $region45: #{feature_propagation_forward.3} parent=43 // pred_check
        %p1623 = pneg %p206
      $region46: #{feature_propagation_forward.3} parent=43 // pred_check_branch
        %1625 = sbr.rel (%p1623) target = $region48
      $region47: #{feature_propagation_forward.3} parent=43 // pred_region
        %s1626 = smul.u32 16, %s24
      $region48: #{feature_propagation_forward.3} parent=43 // pred_fallthru
        _
      // Predicated region
      $region49: #{feature_propagation_forward.3} parent=43 // pred_check
        %p1627 = pneg %p234
      $region50: #{feature_propagation_forward.3} parent=43 // pred_check_branch
        %1629 = sbr.rel (%p1627) target = $region52
      $region51: #{feature_propagation_forward.3} parent=43 // pred_region
        _
      $region52: #{feature_propagation_forward.3} parent=43 // pred_fallthru
        _
    $region44: #{feature_propagation_forward.3} parent=5 // pred_fallthru
      _
    %p1630 = scmp.le.s32.totalorder 2, %s14
    // Predicated region
    $region53: #{feature_propagation_forward.3} parent=5 // pred_check
      %p1631 = pneg %p1630
    $region54: #{feature_propagation_forward.3} parent=5 // pred_check_branch
      %1633 = sbr.rel (%p1631) target = $region56
    $region55: #{feature_propagation_forward.3} parent=5 // pred_region
      %s1634 = ssub.s32 %s14, 2
      // Predicated region
      $region57: #{feature_propagation_forward.3} parent=55 // pred_check
        %p1635 = pneg %p212
      $region58: #{feature_propagation_forward.3} parent=55 // pred_check_branch
        %1637 = sbr.rel (%p1635) target = $region60
      $region59: #{feature_propagation_forward.3} parent=55 // pred_region
        %s1638 = smul.u32 16, %s26
        %p1639 = scmp.lt.s32.totalorder %s25, 1
        %s1640 = scalar_select %p1639, %s25, 1
        %p1641 = scmp.lt.s32.totalorder %s1638, 31
        %s1642 = scalar_select %p1641, %s1638, 31
        %s1643 = smul.addr %s1640, 32
        %s1644 = sadd.s32 %s1642, %s1643
        %s1645 = smul.addr %s1644, 8
        %s1646 = scalar_lea.vmem %s6, %s1645
      $region60: #{feature_propagation_forward.3} parent=55 // pred_fallthru
        _
      // Predicated region
      $region61: #{feature_propagation_forward.3} parent=55 // pred_check
        %p1647 = pneg %p240
      $region62: #{feature_propagation_forward.3} parent=55 // pred_check_branch
        %1649 = sbr.rel (%p1647) target = $region64
      $region63: #{feature_propagation_forward.3} parent=55 // pred_region
        %p1650 = scmp.lt.s32.totalorder %s25, 1
        %s1651 = scalar_select %p1650, %s25, 1
        %p1652 = scmp.lt.s32.totalorder %s26, 1
        %s1653 = scalar_select %p1652, %s26, 1
        %s1654 = smul.addr %s1651, 2
        %s1655 = sadd.s32 %s1653, %s1654
        %s1656 = smul.addr %s1655, 2
        %s1657 = scalar_lea.vmem %s7, %s1656
      $region64: #{feature_propagation_forward.3} parent=55 // pred_fallthru
        _
    $region56: #{feature_propagation_forward.3} parent=5 // pred_fallthru
      _
  $region6: #{feature_propagation_forward.3} parent=0 // loop_footer
    %s18 = sadd.s32 1, %s14
  $region7: #{feature_propagation_forward.3} parent=0 // loop_footer_branch
    %13 = sbr.rel target = $region3
  $region8: #{feature_propagation_forward.3} parent=0 // loop_exit
    _

</llo_original>
